<compile_context>
chip_gen: v6e
topology: v6e:2x2x1
jax: 0.10.0
libtpu: 0.0.40
codegen_flags: <defaults>
</compile_context>

<pallas_src>
import jax
import jax.numpy as jnp
import numpy as np
from jax.experimental import pallas as pl
from jax.experimental.pallas import tpu as pltpu


def _round_up(x, m):
    return (x + m - 1) // m * m


def _cdiv(a, b):
    return -(-a // b)


# ----------------------------------------------------------------------------
# Kernel: grid = (batch tiles, K tiles).  K ("arbitrary") is innermost.
# ----------------------------------------------------------------------------
def metanet_kernel(x_ref, y_ref,
                   wa1_ref, wb1_ref, ba1_ref, bb1_ref,
                   wn_ref, bn_ref,
                   out_ref,
                   acc_a_ref, acc_b_ref, hcat_ref):
    k = pl.program_id(1)

    @pl.when(k == 0)
    def _():
        acc_a_ref[...] = jnp.zeros_like(acc_a_ref)
        acc_b_ref[...] = jnp.zeros_like(acc_b_ref)

    # First-layer GEMMs: cast the f32 input tile to bf16 in-kernel (VPU) so the
    # HBM stream is a single f32 read (no standalone convert pass); MXU runs in
    # bf16 with f32 accumulation into VMEM scratch.
    xb = x_ref[...].astype(jnp.bfloat16)
    yb = y_ref[...].astype(jnp.bfloat16)
    acc_a_ref[...] += jnp.dot(xb, wa1_ref[...], preferred_element_type=jnp.float32)
    acc_b_ref[...] += jnp.dot(yb, wb1_ref[...], preferred_element_type=jnp.float32)

    @pl.when(k == pl.num_programs(1) - 1)
    def _():
        hp = acc_a_ref.shape[-1]
        # Bias + tanh in f32 (VPU/EUP), then write bf16 halves into one
        # (TM, 2*HP) scratch so the folded tail is a single K=2*HP bf16 GEMM.
        h_a = jnp.tanh(acc_a_ref[...] + ba1_ref[...])
        h_b = jnp.tanh(acc_b_ref[...] + bb1_ref[...])
        hcat_ref[:, :hp] = h_a.astype(jnp.bfloat16)
        hcat_ref[:, hp:] = h_b.astype(jnp.bfloat16)

        # logit = cat(F1,F2) @ Wn + bn  ==  [h_a|h_b] @ [wa2@wn1 ; wb2@wn2] + b'
        logit = (jnp.dot(hcat_ref[...], wn_ref[...],
                         preferred_element_type=jnp.float32) + bn_ref[...])

        # Numerically stable softmax.  Padded class columns carry a -1e30 bias
        # so exp() underflows to exactly 0 there.  Exact divide (not approx
        # reciprocal) so real-class probabilities sum to 1 to f32 precision.
        m = jnp.max(logit, axis=-1, keepdims=True)
        e = jnp.exp(logit - m)
        out_ref[...] = (e / jnp.sum(e, axis=-1, keepdims=True)).astype(out_ref.dtype)


# ----------------------------------------------------------------------------
# Param prep: fold the tiny (C x C) tail matmuls into the branch-2 weights,
# pad hidden/class dims to lane-dense multiples of 128, bf16 big weights.
# ----------------------------------------------------------------------------
def prepare_params(params, h_dim, num_classes, id_p):
    C = num_classes
    HP = _round_up(h_dim, 128)
    CP = _round_up(C, 128)

    wn1 = params["wn"][:C, :]     # multiplies F1
    wn2 = params["wn"][C:, :]     # multiplies F2

    wan = params["wa2"] @ wn1                                         # (h, C)
    wbn = params["wb2"] @ wn2                                         # (h, C)
    bfold = params["ba2"] @ wn1 + params["bb2"] @ wn2 + params["bn"]  # (1, C)

    def pad2(a, rows, cols, value=0.0):
        return jnp.pad(a, ((0, rows - a.shape[0]), (0, cols - a.shape[1])),
                       constant_values=value)

    # Stacked folded tail weight: one (2*HP, CP) bf16 GEMM operand.
    wn_stack = jnp.concatenate([pad2(wan, HP, CP), pad2(wbn, HP, CP)], axis=0)

    return {
        "wa1": pad2(params["wa1"], id_p, HP).astype(jnp.bfloat16),
        "wb1": pad2(params["wb1"], id_p, HP).astype(jnp.bfloat16),
        "ba1": pad2(params["ba1"], 1, HP).astype(jnp.float32),
        "bb1": pad2(params["bb1"], 1, HP).astype(jnp.float32),
        "wn":  wn_stack.astype(jnp.bfloat16),
        # padded class columns -> huge negative bias -> softmax prob exactly 0
        "bn":  pad2(bfold, 1, CP, value=-1e30).astype(jnp.float32),
        "HP": HP, "CP": CP, "C": C,
    }


def _vmem_cap_bytes():
    """Generation-aware physical VMEM; conservative fallback = v7x (64 MiB)."""
    try:
        cap = int(getattr(pltpu.get_tpu_info(), "vmem_capacity_bytes", 0))
        if cap >= 32 * 1024 * 1024:
            return cap
    except Exception:
        pass
    return 64 * 1024 * 1024


# ----------------------------------------------------------------------------
# Wrapper: flatten NCHW -> (N, in_dim), tile batch and in_dim, call kernel.
# ----------------------------------------------------------------------------
def metanet_forward(X, Y, params, h_dim, num_classes):
    N = X.shape[0]
    in_dim = int(np.prod(X.shape[1:]))

    # ---- K tiling of in_dim --------------------------------------------------
    TK_MAX = 2048
    TK = min(_round_up(in_dim, 128), TK_MAX)
    id_p = _round_up(in_dim, TK)

    prep = prepare_params(params, h_dim, num_classes, id_p)
    HP, CP, C = prep["HP"], prep["CP"], prep["C"]

    # ---- batch tile from a generation-aware VMEM budget ----------------------
    vmem_cap = _vmem_cap_bytes()
    budget = max(32 * 1024 * 1024, vmem_cap - 16 * 1024 * 1024)

    fixed = (2 * 2 * TK * HP * 2          # wa1/wb1 K-tiles (bf16, 2 bufs each)
             + 2 * 2 * HP * CP * 2        # stacked folded tail weight (bf16)
             + 4 * (HP + CP) * 4 * 2)     # biases
    per_row = (2 * 2 * TK * 4             # X/Y tiles (f32, 2 bufs each)
               + 2 * CP * 4               # output tile (f32, 2 bufs)
               + 2 * HP * 4               # acc_a/acc_b scratch (f32)
               + 2 * HP * 2               # hcat scratch (bf16)
               + 4 * HP * 4 + 3 * CP * 4)  # slack for in-flight temporaries
    tm_cap = int((budget - fixed) // (per_row * 1.25))
    tm_cap = max(16, min(2048, (tm_cap // 16) * 16))

    n_rows = _round_up(N, 16)              # 16-sublane-aligned batch tiles
    if n_rows <= tm_cap:
        TM = n_rows
    else:
        n_tiles = _cdiv(n_rows, tm_cap)
        if n_tiles % 2:
            n_tiles += 1                   # even tile count (v7x: 2 TensorCores)
        TM = _round_up(_cdiv(n_rows, n_tiles), 16)
    pN = _round_up(N, TM)

    # ---- input layout: keep f32, no wrapper-side dtype conversion pass -------
    Xf = X.reshape(N, in_dim)
    Yf = Y.reshape(N, in_dim)
    if pN != N or id_p != in_dim:
        Xf = jnp.pad(Xf, ((0, pN - N), (0, id_p - in_dim)))
        Yf = jnp.pad(Yf, ((0, pN - N), (0, id_p - in_dim)))

    grid = (pN // TM, id_p // TK)

    in_specs = [
        pl.BlockSpec((TM, TK), lambda i, k: (i, k)),   # X tile
        pl.BlockSpec((TM, TK), lambda i, k: (i, k)),   # Y tile
        pl.BlockSpec((TK, HP), lambda i, k: (k, 0)),   # wa1 K-tile
        pl.BlockSpec((TK, HP), lambda i, k: (k, 0)),   # wb1 K-tile
        pl.BlockSpec((1, HP),  lambda i, k: (0, 0)),   # ba1 (resident)
        pl.BlockSpec((1, HP),  lambda i, k: (0, 0)),   # bb1 (resident)
        pl.BlockSpec((2 * HP, CP), lambda i, k: (0, 0)),  # stacked folded tail W
        pl.BlockSpec((1, CP),  lambda i, k: (0, 0)),   # folded bias (-1e30 pad)
    ]
    out_specs = pl.BlockSpec((TM, CP), lambda i, k: (i, 0))

    scratch_shapes = [
        pltpu.VMEM((TM, HP), jnp.float32),        # acc_a
        pltpu.VMEM((TM, HP), jnp.float32),        # acc_b
        pltpu.VMEM((TM, 2 * HP), jnp.bfloat16),   # [h_a | h_b] for fused tail
    ]

    cost = pl.CostEstimate(
        flops=int(2 * 2 * pN * id_p * HP + 2 * pN * (2 * HP) * CP),
        transcendentals=int(2 * pN * HP + pN * CP),
        bytes_accessed=int(2 * pN * id_p * 4     # X, Y (f32)
                           + 2 * id_p * HP * 2   # wa1, wb1 (bf16)
                           + 2 * HP * CP * 2     # folded tail weight (bf16)
                           + pN * CP * 4),       # output
    )

    out = pl.pallas_call(
        metanet_kernel,
        out_shape=jax.ShapeDtypeStruct((pN, CP), jnp.float32),
        grid=grid,
        in_specs=in_specs,
        out_specs=out_specs,
        scratch_shapes=scratch_shapes,
        compiler_params=pltpu.CompilerParams(
            dimension_semantics=("parallel", "arbitrary"),
            vmem_limit_bytes=int(budget)),
        cost_estimate=cost,
    )(Xf, Yf,
      prep["wa1"], prep["wb1"], prep["ba1"], prep["bb1"],
      prep["wn"], prep["bn"])

    # Drop padded rows / padded class columns.
    return out[:N, :C]


# ----------------------------------------------------------------------------
# Synthetic params (shapes mirror the PyTorch module) and pure-JAX reference.
# ----------------------------------------------------------------------------
def init_params(key, in_dim, h_dim, num_classes):
    ks = jax.random.split(key, 9)

    def xavier(k, fan_in, fan_out):
        std = float(np.sqrt(2.0 / (fan_in + fan_out)))
        return jax.random.normal(k, (fan_in, fan_out), jnp.float32) * std

    C = num_classes
    return {
        # Branch_A
        "wa1": xavier(ks[0], in_dim, h_dim),
        "ba1": jax.random.normal(ks[1], (1, h_dim), jnp.float32) * 0.01,
        "wa2": xavier(ks[2], h_dim, C),
        "ba2": jax.random.normal(ks[3], (1, C), jnp.float32) * 0.01,
        # Branch_B
        "wb1": xavier(ks[4], in_dim, h_dim),
        "bb1": jax.random.normal(ks[5], (1, h_dim), jnp.float32) * 0.01,
        "wb2": xavier(ks[6], h_dim, C),
        "bb2": jax.random.normal(ks[7], (1, C), jnp.float32) * 0.01,
        # net[0]: Linear(2C, C), xavier_normal_ weight, zero bias
        "wn": xavier(ks[8], 2 * C, C),
        "bn": jnp.zeros((1, C), jnp.float32),
    }


def metanet_ref(X, Y, params):
    """Pure-JAX reference (mirrors the kernel's bf16 quantization of the
    first-layer inputs/weights so the comparison tolerance stays tight; the
    tail is the exact, un-folded f32 module math)."""
    N = X.shape[0]
    bq = lambda a: a.astype(jnp.bfloat16).astype(jnp.float32)
    Xf = bq(X.reshape(N, -1))
    Yf = bq(Y.reshape(N, -1))
    f1 = jnp.tanh(Xf @ bq(params["wa1"]) + params["ba1"]) @ params["wa2"] + params["ba2"]
    f2 = jnp.tanh(Yf @ bq(params["wb1"]) + params["bb1"]) @ params["wb2"] + params["bb2"]
    hin = jnp.concatenate([f1, f2], axis=1)
    logit = hin @ params["wn"] + params["bn"]
    return jax.nn.softmax(logit, axis=-1)


if __name__ == "__main__":
    # Small shapes consistent with the forward: X, Y are NCHW images.
    N, C_in, H, W = 2, 4, 16, 16
    in_dim = C_in * H * W          # 1024
    h_dim = 32
    num_classes = 8

    key = jax.random.PRNGKey(0)
    kx, ky, kp = jax.random.split(key, 3)
    X = jax.random.normal(kx, (N, C_in, H, W), jnp.float32)
    Y = jax.random.normal(ky, (N, C_in, H, W), jnp.float32)
    params = init_params(kp, in_dim, h_dim, num_classes)

    out = metanet_forward(X, Y, params, h_dim, num_classes)
    out = jax.block_until_ready(out)

    ref = metanet_ref(X, Y, params)
    np.testing.assert_allclose(np.asarray(out), np.asarray(ref),
                               rtol=1e-2, atol=1e-2)
    assert out.shape == (N, num_classes)
    assert np.allclose(np.asarray(out).sum(axis=-1), 1.0, atol=1e-3)

    print("KERNEL_OK")
</pallas_src>

<mosaic_0001>
module attributes {stable_mosaic.version = 11 : i64} {
  func.func @metanet_kernel(%arg0: i32, %arg1: i32, %arg2: memref<16x1024xf32, #tpu.memory_space<vmem>>, %arg3: memref<16x1024xf32, #tpu.memory_space<vmem>>, %arg4: memref<1024x128xbf16, #tpu.memory_space<vmem>>, %arg5: memref<1024x128xbf16, #tpu.memory_space<vmem>>, %arg6: memref<1x128xf32, #tpu.memory_space<vmem>>, %arg7: memref<1x128xf32, #tpu.memory_space<vmem>>, %arg8: memref<256x128xbf16, #tpu.memory_space<vmem>>, %arg9: memref<1x128xf32, #tpu.memory_space<vmem>>, %arg10: memref<16x128xf32, #tpu.memory_space<vmem>>, %arg11: memref<16x128xf32, #tpu.memory_space<vmem>>, %arg12: memref<16x128xf32, #tpu.memory_space<vmem>>, %arg13: memref<16x256xbf16, #tpu.memory_space<vmem>>) attributes {dimension_semantics = [#tpu.dimension_semantics<parallel>, #tpu.dimension_semantics<arbitrary>], iteration_bounds = array<i64: 1, 1>, scalar_prefetch = 0 : i64, scratch_operands = 3 : i64, tpu.core_type = #tpu.core_type<tc>, window_params = [{transform_indices = @transform_0, window_bounds = array<i64: 16, 1024>}, {transform_indices = @transform_1, window_bounds = array<i64: 16, 1024>}, {transform_indices = @transform_2, window_bounds = array<i64: 1024, 128>}, {transform_indices = @transform_3, window_bounds = array<i64: 1024, 128>}, {pipeline_mode = #tpu.pipeline_mode<synchronous>, transform_indices = @transform_4, window_bounds = array<i64: 1, 128>}, {pipeline_mode = #tpu.pipeline_mode<synchronous>, transform_indices = @transform_5, window_bounds = array<i64: 1, 128>}, {pipeline_mode = #tpu.pipeline_mode<synchronous>, transform_indices = @transform_6, window_bounds = array<i64: 256, 128>}, {pipeline_mode = #tpu.pipeline_mode<synchronous>, transform_indices = @transform_7, window_bounds = array<i64: 1, 128>}, {transform_indices = @transform_8, window_bounds = array<i64: 16, 128>}]} {
    %c0_i32 = arith.constant 0 : i32
    %0 = arith.cmpi eq, %arg1, %c0_i32 : i32
    %1 = arith.extui %0 : i1 to i32
    %c0_i32_0 = arith.constant 0 : i32
    %2 = arith.cmpi ne, %1, %c0_i32_0 : i32
    scf.if %2 {
      %cst_19 = arith.constant 0.000000e+00 : f32
      %20 = vector.broadcast %cst_19 : f32 to vector<16x128xf32>
      %c0_20 = arith.constant 0 : index
      %c0_21 = arith.constant 0 : index
      %21 = vector.load %arg11[%c0_20, %c0_21] : memref<16x128xf32, #tpu.memory_space<vmem>>, vector<16x128xf32>
      tpu.vector_store %arg11[%c0_20, %c0_21], %20 {strides = array<i32>} : memref<16x128xf32, #tpu.memory_space<vmem>>, vector<16x128xf32>,
      %cst_22 = arith.constant 0.000000e+00 : f32
      %22 = vector.broadcast %cst_22 : f32 to vector<16x128xf32>
      %c0_23 = arith.constant 0 : index
      %c0_24 = arith.constant 0 : index
      %23 = vector.load %arg12[%c0_23, %c0_24] : memref<16x128xf32, #tpu.memory_space<vmem>>, vector<16x128xf32>
      tpu.vector_store %arg12[%c0_23, %c0_24], %22 {strides = array<i32>} : memref<16x128xf32, #tpu.memory_space<vmem>>, vector<16x128xf32>,
    } else {
    }
    %c0 = arith.constant 0 : index
    %c0_1 = arith.constant 0 : index
    %3 = vector.load %arg2[%c0, %c0_1] : memref<16x1024xf32, #tpu.memory_space<vmem>>, vector<16x1024xf32>
    %4 = arith.truncf %3 : vector<16x1024xf32> to vector<16x1024xbf16>
    %c0_2 = arith.constant 0 : index
    %c0_3 = arith.constant 0 : index
    %5 = vector.load %arg3[%c0_2, %c0_3] : memref<16x1024xf32, #tpu.memory_space<vmem>>, vector<16x1024xf32>
    %6 = arith.truncf %5 : vector<16x1024xf32> to vector<16x1024xbf16>
    %c0_4 = arith.constant 0 : index
    %c0_5 = arith.constant 0 : index
    %7 = vector.load %arg11[%c0_4, %c0_5] : memref<16x128xf32, #tpu.memory_space<vmem>>, vector<16x128xf32>
    %c0_6 = arith.constant 0 : index
    %c0_7 = arith.constant 0 : index
    %8 = vector.load %arg4[%c0_6, %c0_7] : memref<1024x128xbf16, #tpu.memory_space<vmem>>, vector<1024x128xbf16>
    %cst = arith.constant dense<0.000000e+00> : vector<16x128xf32>
    %9 = tpu.matmul %4, %8, %cst {dimension_numbers = #tpu.dot_dimension_numbers<[1], [0], [0], [1], [0, 0, 1, 1], [], []>} : vector<16x1024xbf16>, vector<1024x128xbf16>, vector<16x128xf32> -> vector<16x128xf32>
    %10 = arith.addf %7, %9 : vector<16x128xf32>
    %c0_8 = arith.constant 0 : index
    %c0_9 = arith.constant 0 : index
    %11 = vector.load %arg11[%c0_8, %c0_9] : memref<16x128xf32, #tpu.memory_space<vmem>>, vector<16x128xf32>
    tpu.vector_store %arg11[%c0_8, %c0_9], %10 {strides = array<i32>} : memref<16x128xf32, #tpu.memory_space<vmem>>, vector<16x128xf32>,
    %c0_10 = arith.constant 0 : index
    %c0_11 = arith.constant 0 : index
    %12 = vector.load %arg12[%c0_10, %c0_11] : memref<16x128xf32, #tpu.memory_space<vmem>>, vector<16x128xf32>
    %c0_12 = arith.constant 0 : index
    %c0_13 = arith.constant 0 : index
    %13 = vector.load %arg5[%c0_12, %c0_13] : memref<1024x128xbf16, #tpu.memory_space<vmem>>, vector<1024x128xbf16>
    %cst_14 = arith.constant dense<0.000000e+00> : vector<16x128xf32>
    %14 = tpu.matmul %6, %13, %cst_14 {dimension_numbers = #tpu.dot_dimension_numbers<[1], [0], [0], [1], [0, 0, 1, 1], [], []>} : vector<16x1024xbf16>, vector<1024x128xbf16>, vector<16x128xf32> -> vector<16x128xf32>
    %15 = arith.addf %12, %14 : vector<16x128xf32>
    %c0_15 = arith.constant 0 : index
    %c0_16 = arith.constant 0 : index
    %16 = vector.load %arg12[%c0_15, %c0_16] : memref<16x128xf32, #tpu.memory_space<vmem>>, vector<16x128xf32>
    tpu.vector_store %arg12[%c0_15, %c0_16], %15 {strides = array<i32>} : memref<16x128xf32, #tpu.memory_space<vmem>>, vector<16x128xf32>,
    %c0_i32_17 = arith.constant 0 : i32
    %17 = arith.cmpi eq, %arg1, %c0_i32_17 : i32
    %18 = arith.extui %17 : i1 to i32
    %c0_i32_18 = arith.constant 0 : i32
    %19 = arith.cmpi ne, %18, %c0_i32_18 : i32
    scf.if %19 {
      %c0_19 = arith.constant 0 : index
      %c0_20 = arith.constant 0 : index
      %20 = vector.load %arg11[%c0_19, %c0_20] : memref<16x128xf32, #tpu.memory_space<vmem>>, vector<16x128xf32>
      %c0_21 = arith.constant 0 : index
      %c0_22 = arith.constant 0 : index
      %21 = vector.load %arg6[%c0_21, %c0_22] : memref<1x128xf32, #tpu.memory_space<vmem>>, vector<1x128xf32>
      %22 = vector.broadcast %21 : vector<1x128xf32> to vector<16x128xf32>
      %23 = arith.addf %20, %22 : vector<16x128xf32>
      %24 = math.tanh %23 : vector<16x128xf32>
      %c0_23 = arith.constant 0 : index
      %c0_24 = arith.constant 0 : index
      %25 = vector.load %arg12[%c0_23, %c0_24] : memref<16x128xf32, #tpu.memory_space<vmem>>, vector<16x128xf32>
      %c0_25 = arith.constant 0 : index
      %c0_26 = arith.constant 0 : index
      %26 = vector.load %arg7[%c0_25, %c0_26] : memref<1x128xf32, #tpu.memory_space<vmem>>, vector<1x128xf32>
      %27 = vector.broadcast %26 : vector<1x128xf32> to vector<16x128xf32>
      %28 = arith.addf %25, %27 : vector<16x128xf32>
      %29 = math.tanh %28 : vector<16x128xf32>
      %30 = arith.truncf %24 : vector<16x128xf32> to vector<16x128xbf16>
      %c0_27 = arith.constant 0 : index
      %c0_28 = arith.constant 0 : index
      %31 = vector.load %arg13[%c0_27, %c0_28] : memref<16x256xbf16, #tpu.memory_space<vmem>>, vector<16x128xbf16>
      tpu.vector_store %arg13[%c0_27, %c0_28], %30 {strides = array<i32>} : memref<16x256xbf16, #tpu.memory_space<vmem>>, vector<16x128xbf16>,
      %32 = arith.truncf %29 : vector<16x128xf32> to vector<16x128xbf16>
      %c0_29 = arith.constant 0 : index
      %c128 = arith.constant 128 : index
      %33 = vector.load %arg13[%c0_29, %c128] : memref<16x256xbf16, #tpu.memory_space<vmem>>, vector<16x128xbf16>
      tpu.vector_store %arg13[%c0_29, %c128], %32 {strides = array<i32>} : memref<16x256xbf16, #tpu.memory_space<vmem>>, vector<16x128xbf16>,
      %c0_30 = arith.constant 0 : index
      %c0_31 = arith.constant 0 : index
      %34 = vector.load %arg13[%c0_30, %c0_31] : memref<16x256xbf16, #tpu.memory_space<vmem>>, vector<16x256xbf16>
      %c0_32 = arith.constant 0 : index
      %c0_33 = arith.constant 0 : index
      %35 = vector.load %arg8[%c0_32, %c0_33] : memref<256x128xbf16, #tpu.memory_space<vmem>>, vector<256x128xbf16>
      %cst_34 = arith.constant dense<0.000000e+00> : vector<16x128xf32>
      %36 = tpu.matmul %34, %35, %cst_34 {dimension_numbers = #tpu.dot_dimension_numbers<[1], [0], [0], [1], [0, 0, 1, 1], [], []>} : vector<16x256xbf16>, vector<256x128xbf16>, vector<16x128xf32> -> vector<16x128xf32>
      %c0_35 = arith.constant 0 : index
      %c0_36 = arith.constant 0 : index
      %37 = vector.load %arg9[%c0_35, %c0_36] : memref<1x128xf32, #tpu.memory_space<vmem>>, vector<1x128xf32>
      %38 = vector.broadcast %37 : vector<1x128xf32> to vector<16x128xf32>
      %39 = arith.addf %36, %38 : vector<16x128xf32>
      %cst_37 = arith.constant dense<0xFF800000> : vector<16xf32>
      %40 = vector.multi_reduction <maximumf>, %39, %cst_37 [1] : vector<16x128xf32> to vector<16xf32>
      %41 = vector.shape_cast %40 : vector<16xf32> to vector<16x1xf32>
      %42 = vector.broadcast %41 : vector<16x1xf32> to vector<16x128xf32>
      %43 = arith.subf %39, %42 : vector<16x128xf32>
      %44 = math.exp %43 : vector<16x128xf32>
      %cst_38 = arith.constant dense<0.000000e+00> : vector<16xf32>
      %45 = vector.multi_reduction <add>, %44, %cst_38 [1] : vector<16x128xf32> to vector<16xf32>
      %46 = vector.shape_cast %45 : vector<16xf32> to vector<16x1xf32>
      %47 = vector.broadcast %46 : vector<16x1xf32> to vector<16x128xf32>
      %48 = arith.divf %44, %47 : vector<16x128xf32>
      %c0_39 = arith.constant 0 : index
      %c0_40 = arith.constant 0 : index
      %49 = vector.load %arg10[%c0_39, %c0_40] : memref<16x128xf32, #tpu.memory_space<vmem>>, vector<16x128xf32>
      tpu.vector_store %arg10[%c0_39, %c0_40], %48 {strides = array<i32>} : memref<16x128xf32, #tpu.memory_space<vmem>>, vector<16x128xf32>,
    } else {
    }
    return
  }
  func.func @transform_0(%arg0: i32, %arg1: i32) -> (i32, i32) {
    %c0_i32 = arith.constant 0 : i32
    return %arg0, %arg1 : i32, i32
  }
  func.func @transform_1(%arg0: i32, %arg1: i32) -> (i32, i32) {
    %c0_i32 = arith.constant 0 : i32
    return %arg0, %arg1 : i32, i32
  }
  func.func @transform_2(%arg0: i32, %arg1: i32) -> (i32, i32) {
    %c0_i32 = arith.constant 0 : i32
    %c0_i32_0 = arith.constant 0 : i32
    return %arg1, %c0_i32 : i32, i32
  }
  func.func @transform_3(%arg0: i32, %arg1: i32) -> (i32, i32) {
    %c0_i32 = arith.constant 0 : i32
    %c0_i32_0 = arith.constant 0 : i32
    return %arg1, %c0_i32 : i32, i32
  }
  func.func @transform_4(%arg0: i32, %arg1: i32) -> (i32, i32) {
    %c0_i32 = arith.constant 0 : i32
    %c0_i32_0 = arith.constant 0 : i32
    %c0_i32_1 = arith.constant 0 : i32
    return %c0_i32, %c0_i32_0 : i32, i32
  }
  func.func @transform_5(%arg0: i32, %arg1: i32) -> (i32, i32) {
    %c0_i32 = arith.constant 0 : i32
    %c0_i32_0 = arith.constant 0 : i32
    %c0_i32_1 = arith.constant 0 : i32
    return %c0_i32, %c0_i32_0 : i32, i32
  }
  func.func @transform_6(%arg0: i32, %arg1: i32) -> (i32, i32) {
    %c0_i32 = arith.constant 0 : i32
    %c0_i32_0 = arith.constant 0 : i32
    %c0_i32_1 = arith.constant 0 : i32
    return %c0_i32, %c0_i32_0 : i32, i32
  }
  func.func @transform_7(%arg0: i32, %arg1: i32) -> (i32, i32) {
    %c0_i32 = arith.constant 0 : i32
    %c0_i32_0 = arith.constant 0 : i32
    %c0_i32_1 = arith.constant 0 : i32
    return %c0_i32, %c0_i32_0 : i32, i32
  }
  func.func @transform_8(%arg0: i32, %arg1: i32) -> (i32, i32) {
    %c0_i32 = arith.constant 0 : i32
    %c0_i32_0 = arith.constant 0 : i32
    return %arg0, %c0_i32 : i32, i32
  }
}

</mosaic_0001>

<llo_original>
// kernel: tpu_custom_call.1
$region0: #{tpu_custom_call.1}
  #allocation0 [shape = 'u32[]', space=smem, size = 0x4, offset = 0x4, fixed_abs, tag = 'smem constant byte address 0x4 - core index']
  #allocation1 [shape = 'u32[144,128]{1,0:T(1,128)}', space=vmem, size = 0x12000, scoped, tag = 'internal scratch']
  #allocation2 [shape = 'f32[16,128]{1,0:T(8,128)}', space=vmem, size = 0x2000, scoped, tag = 'scratch operand']
  #allocation3 [shape = 'f32[16,128]{1,0:T(8,128)}', space=vmem, size = 0x2000, scoped, tag = 'scratch operand']
  #allocation4 [shape = 'bf16[16,256]{1,0:T(8,128)(2,1)}', space=vmem, size = 0x2000, scoped, tag = 'scratch operand']
  %s0 = inlined_call_operand.hbm [shape: f32[16,1024], index: 0, kind: input, shape index: {}]
  %s1 = inlined_call_operand.hbm [shape: f32[16,1024], index: 1, kind: input, shape index: {}]
  %s2 = inlined_call_operand.hbm [shape: bf16[1024,128], index: 2, kind: input, shape index: {}]
  %s3 = inlined_call_operand.hbm [shape: bf16[1024,128], index: 3, kind: input, shape index: {}]
  %s4 = inlined_call_operand.vmem [shape: f32[1,128], index: 4, kind: input, shape index: {}]
  %s5 = inlined_call_operand.vmem [shape: f32[1,128], index: 5, kind: input, shape index: {}]
  %s6 = inlined_call_operand.hbm [shape: bf16[256,128], index: 6, kind: input, shape index: {}]
  %s7 = inlined_call_operand.vmem [shape: f32[1,128], index: 7, kind: input, shape index: {}]
  %s8 = inlined_call_operand.hbm [shape: f32[16,128], index: 8, kind: output, shape index: {}]
  %s9 = sld [smem:[#allocation0]]
  $region70: #{tpu_custom_call.1} parent=0
    _
  %s11 = ssub.s32 1, %s9
  %s12 = scalar_select 0, %s11, %s9
  $region1: #{tpu_custom_call.1} parent=0
    #allocation5 [shape = 'u8[65536]{0}', space=vmem, size = 0x10000, scoped, tag = 'input window, operand 0, single buffered']
    #allocation6 [shape = 's32[1]{0}', space=sflag, size = 0x4, scoped, tag = 'scoped memory for tpu_custom_call.1']
    #allocation7 [shape = 's32[1]{0}', space=sflag, size = 0x4, scoped, tag = 'scoped memory for tpu_custom_call.1']
    #allocation8 [shape = 'u8[65536]{0}', space=vmem, size = 0x10000, scoped, tag = 'input window, operand 1, single buffered']
    #allocation9 [shape = 's32[1]{0}', space=sflag, size = 0x4, scoped, tag = 'scoped memory for tpu_custom_call.1']
    #allocation10 [shape = 'u8[262144]{0}', space=vmem, size = 0x40000, scoped, tag = 'input window, operand 2, single buffered']
    #allocation11 [shape = 'u8[262144]{0}', space=vmem, size = 0x40000, scoped, tag = 'input window, operand 3, single buffered']
    #allocation12 [shape = 's32[1]{0}', space=sflag, size = 0x4, scoped, tag = 'scoped memory for tpu_custom_call.1']
    #allocation13 [shape = 'u8[65536]{0}', space=vmem, size = 0x10000, scoped, tag = 'input window, operand 6, single buffered']
    #allocation14 [shape = 'u8[8192]{0}', space=vmem, size = 0x2000, scoped, tag = 'output window, operand 0, single buffered']
    %13 = vsyncpa [#allocation6], 0
    %14 = vsyncpa [#allocation9], 0
    %15 = vsyncpa [#allocation12], 0
    %16 = vsyncpa [#allocation7], 0
    // Predicated region
    $region2: #{tpu_custom_call.1} parent=1 // pred_check
      _
    $region3: #{tpu_custom_call.1} parent=1 // pred_check_branch
      %18 = sbr.rel (0) target = $region5
    $region4: #{tpu_custom_call.1} parent=1 // pred_region
      %s20 = ssub.s32 2048, 2048
      %21 = vsyncadd [#allocation6], %s20
      %s22 = sshll.u32 [#allocation5], 4
      %s23 = int_to_ptr.vmem [resolvable:$true] %s22
      %28 = dma.hbm_to_vmem [thread:$0]  %s0, 2048, %s23, [#allocation6], 1024, 1024, 64
    $region5: #{tpu_custom_call.1} parent=1 // pred_fallthru
      _
    // Predicated region
    $region6: #{tpu_custom_call.1} parent=1 // pred_check
      _
    $region7: #{tpu_custom_call.1} parent=1 // pred_check_branch
      %30 = sbr.rel (0) target = $region9
    $region8: #{tpu_custom_call.1} parent=1 // pred_region
      %s32 = ssub.s32 2048, 2048
      %33 = vsyncadd [#allocation9], %s32
      %s34 = sshll.u32 [#allocation8], 4
      %s35 = int_to_ptr.vmem [resolvable:$true] %s34
      %40 = dma.hbm_to_vmem [thread:$0]  %s1, 2048, %s35, [#allocation9], 1024, 1024, 64
    $region9: #{tpu_custom_call.1} parent=1 // pred_fallthru
      _
    // Predicated region
    $region10: #{tpu_custom_call.1} parent=1 // pred_check
      _
    $region11: #{tpu_custom_call.1} parent=1 // pred_check_branch
      %42 = sbr.rel (0) target = $region13
    $region12: #{tpu_custom_call.1} parent=1 // pred_region
      %s44 = ssub.s32 8192, 8192
      %45 = vsyncadd [#allocation9], %s44
      %s46 = sshll.u32 [#allocation10], 4
      %s47 = int_to_ptr.vmem [resolvable:$true] %s46
      %52 = dma.hbm_to_vmem [thread:$0]  %s2, 8192, %s47, [#allocation9], 64, 64, 4
    $region13: #{tpu_custom_call.1} parent=1 // pred_fallthru
      _
    // Predicated region
    $region14: #{tpu_custom_call.1} parent=1 // pred_check
      _
    $region15: #{tpu_custom_call.1} parent=1 // pred_check_branch
      %54 = sbr.rel (0) target = $region17
    $region16: #{tpu_custom_call.1} parent=1 // pred_region
      %s56 = ssub.s32 8192, 8192
      %57 = vsyncadd [#allocation12], %s56
      %s58 = sshll.u32 [#allocation11], 4
      %s59 = int_to_ptr.vmem [resolvable:$true] %s58
      %64 = dma.hbm_to_vmem [thread:$0]  %s3, 8192, %s59, [#allocation12], 64, 64, 4
    $region17: #{tpu_custom_call.1} parent=1 // pred_fallthru
      _
    // Predicated region
    $region18: #{tpu_custom_call.1} parent=1 // pred_check
      _
    $region19: #{tpu_custom_call.1} parent=1 // pred_check_branch
      %66 = sbr.rel (0) target = $region21
    $region20: #{tpu_custom_call.1} parent=1 // pred_region
      _
    $region21: #{tpu_custom_call.1} parent=1 // pred_fallthru
      _
    // Predicated region
    $region22: #{tpu_custom_call.1} parent=1 // pred_check
      _
    $region23: #{tpu_custom_call.1} parent=1 // pred_check_branch
      %68 = sbr.rel (0) target = $region25
    $region24: #{tpu_custom_call.1} parent=1 // pred_region
      _
    $region25: #{tpu_custom_call.1} parent=1 // pred_fallthru
      _
    // Predicated region
    $region26: #{tpu_custom_call.1} parent=1 // pred_check
      _
    $region27: #{tpu_custom_call.1} parent=1 // pred_check_branch
      %70 = sbr.rel (0) target = $region29
    $region28: #{tpu_custom_call.1} parent=1 // pred_region
      %s72 = ssub.s32 2048, 2048
      %73 = vsyncadd [#allocation12], %s72
      %s74 = sshll.u32 [#allocation13], 4
      %s75 = int_to_ptr.vmem [resolvable:$true] %s74
      %80 = dma.hbm_to_vmem [thread:$0]  %s6, 2048, %s75, [#allocation12], 64, 64, 4
    $region29: #{tpu_custom_call.1} parent=1 // pred_fallthru
      _
    // Predicated region
    $region30: #{tpu_custom_call.1} parent=1 // pred_check
      _
    $region31: #{tpu_custom_call.1} parent=1 // pred_check_branch
      %82 = sbr.rel (0) target = $region33
    $region32: #{tpu_custom_call.1} parent=1 // pred_region
      _
    $region33: #{tpu_custom_call.1} parent=1 // pred_fallthru
      _
    // Predicated region
    $region34: #{tpu_custom_call.1} parent=1 // pred_check
      _
    $region35: #{tpu_custom_call.1} parent=1 // pred_check_branch
      %84 = sbr.rel (0) target = $region37
    $region36: #{tpu_custom_call.1} parent=1 // pred_region
      %85 = dma.done [#allocation6], 2048
    $region37: #{tpu_custom_call.1} parent=1 // pred_fallthru
      _
    // Predicated region
    $region38: #{tpu_custom_call.1} parent=1 // pred_check
      _
    $region39: #{tpu_custom_call.1} parent=1 // pred_check_branch
      %87 = sbr.rel (0) target = $region41
    $region40: #{tpu_custom_call.1} parent=1 // pred_region
      %88 = dma.done [#allocation9], 2048
    $region41: #{tpu_custom_call.1} parent=1 // pred_fallthru
      _
    // Predicated region
    $region42: #{tpu_custom_call.1} parent=1 // pred_check
      _
    $region43: #{tpu_custom_call.1} parent=1 // pred_check_branch
      %90 = sbr.rel (0) target = $region45
    $region44: #{tpu_custom_call.1} parent=1 // pred_region
      %91 = dma.done [#allocation9], 8192
    $region45: #{tpu_custom_call.1} parent=1 // pred_fallthru
      _
    // Predicated region
    $region46: #{tpu_custom_call.1} parent=1 // pred_check
      _
    $region47: #{tpu_custom_call.1} parent=1 // pred_check_branch
      %93 = sbr.rel (0) target = $region49
    $region48: #{tpu_custom_call.1} parent=1 // pred_region
      %94 = dma.done [#allocation12], 8192
    $region49: #{tpu_custom_call.1} parent=1 // pred_fallthru
      _
    // Predicated region
    $region50: #{tpu_custom_call.1} parent=1 // pred_check
      _
    $region51: #{tpu_custom_call.1} parent=1 // pred_check_branch
      %96 = sbr.rel (0) target = $region53
    $region52: #{tpu_custom_call.1} parent=1 // pred_region
      %97 = dma.done [#allocation12], 2048
    $region53: #{tpu_custom_call.1} parent=1 // pred_fallthru
      _
    %p99 = scmp.eq.s32.totalorder 0, 0
    // Predicated region
    $region54: #{tpu_custom_call.1} parent=1 // pred_check
      %p100 = pneg %p99
    $region55: #{tpu_custom_call.1} parent=1 // pred_check_branch
      %102 = sbr.rel (%p100) target = $region57
    $region56: #{tpu_custom_call.1} parent=1 // pred_region
      %103 = vst [vmem:[#allocation2] sm:$0xff] 0.0
      %104 = vst [vmem:[#allocation2 + $0x8] sm:$0xff] 0.0
      %105 = vst [vmem:[#allocation3] sm:$0xff] 0.0
      %106 = vst [vmem:[#allocation3 + $0x8] sm:$0xff] 0.0
    $region57: #{tpu_custom_call.1} parent=1 // pred_fallthru
      _
    %v107 = vld [vmem:[#allocation5] sm:$0xff]
    %v108 = vld [vmem:[#allocation5 + $0x8] sm:$0xff]
    %v109 = vld [vmem:[#allocation5 + $0x10] sm:$0xff]
    %v110 = vld [vmem:[#allocation5 + $0x18] sm:$0xff]
    %v111 = vld [vmem:[#allocation5 + $0x20] sm:$0xff]
    %v112 = vld [vmem:[#allocation5 + $0x28] sm:$0xff]
    %v113 = vld [vmem:[#allocation5 + $0x30] sm:$0xff]
    %v114 = vld [vmem:[#allocation5 + $0x38] sm:$0xff]
    %v115 = vld [vmem:[#allocation5 + $0x40] sm:$0xff]
    %v116 = vld [vmem:[#allocation5 + $0x48] sm:$0xff]
    %v117 = vld [vmem:[#allocation5 + $0x50] sm:$0xff]
    %v118 = vld [vmem:[#allocation5 + $0x58] sm:$0xff]
    %v119 = vld [vmem:[#allocation5 + $0x60] sm:$0xff]
    %v120 = vld [vmem:[#allocation5 + $0x68] sm:$0xff]
    %v121 = vld [vmem:[#allocation5 + $0x70] sm:$0xff]
    %v122 = vld [vmem:[#allocation5 + $0x78] sm:$0xff]
    %v123 = vpack.c.bf16 %v115, %v107
    %v124 = vpack.c.bf16 %v116, %v108
    %v125 = vpack.c.bf16 %v117, %v109
    %v126 = vpack.c.bf16 %v118, %v110
    %v127 = vpack.c.bf16 %v119, %v111
    %v128 = vpack.c.bf16 %v120, %v112
    %v129 = vpack.c.bf16 %v121, %v113
    %v130 = vpack.c.bf16 %v122, %v114
    %v131 = vld [vmem:[#allocation8] sm:$0xff]
    %v132 = vld [vmem:[#allocation8 + $0x8] sm:$0xff]
    %v133 = vld [vmem:[#allocation8 + $0x10] sm:$0xff]
    %v134 = vld [vmem:[#allocation8 + $0x18] sm:$0xff]
    %v135 = vld [vmem:[#allocation8 + $0x20] sm:$0xff]
    %v136 = vld [vmem:[#allocation8 + $0x28] sm:$0xff]
    %v137 = vld [vmem:[#allocation8 + $0x30] sm:$0xff]
    %v138 = vld [vmem:[#allocation8 + $0x38] sm:$0xff]
    %v139 = vld [vmem:[#allocation8 + $0x40] sm:$0xff]
    %v140 = vld [vmem:[#allocation8 + $0x48] sm:$0xff]
    %v141 = vld [vmem:[#allocation8 + $0x50] sm:$0xff]
    %v142 = vld [vmem:[#allocation8 + $0x58] sm:$0xff]
    %v143 = vld [vmem:[#allocation8 + $0x60] sm:$0xff]
    %v144 = vld [vmem:[#allocation8 + $0x68] sm:$0xff]
    %v145 = vld [vmem:[#allocation8 + $0x70] sm:$0xff]
    %v146 = vld [vmem:[#allocation8 + $0x78] sm:$0xff]
    %v147 = vpack.c.bf16 %v139, %v131
    %v148 = vpack.c.bf16 %v140, %v132
    %v149 = vpack.c.bf16 %v141, %v133
    %v150 = vpack.c.bf16 %v142, %v134
    %v151 = vpack.c.bf16 %v143, %v135
    %v152 = vpack.c.bf16 %v144, %v136
    %v153 = vpack.c.bf16 %v145, %v137
    %v154 = vpack.c.bf16 %v146, %v138
    %v155 = vld [vmem:[#allocation2] sm:$0xff]
    %v156 = vld [vmem:[#allocation2 + $0x8] sm:$0xff]
    %v157 = vld [vmem:[#allocation10] sm:$0xf]
    %v158 = vld [vmem:[#allocation10 + $0x4] sm:$0xf]
    %v159 = vld [vmem:[#allocation10 + $0x8] sm:$0xf]
    %v160 = vld [vmem:[#allocation10 + $0xc] sm:$0xf]
    %v161 = vld [vmem:[#allocation10 + $0x10] sm:$0xf]
    %v162 = vld [vmem:[#allocation10 + $0x14] sm:$0xf]
    %v163 = vld [vmem:[#allocation10 + $0x18] sm:$0xf]
    %v164 = vld [vmem:[#allocation10 + $0x1c] sm:$0xf]
    %v165 = vld [vmem:[#allocation10 + $0x20] sm:$0xf]
    %v166 = vld [vmem:[#allocation10 + $0x24] sm:$0xf]
    %v167 = vld [vmem:[#allocation10 + $0x28] sm:$0xf]
    %v168 = vld [vmem:[#allocation10 + $0x2c] sm:$0xf]
    %v169 = vld [vmem:[#allocation10 + $0x30] sm:$0xf]
    %v170 = vld [vmem:[#allocation10 + $0x34] sm:$0xf]
    %v171 = vld [vmem:[#allocation10 + $0x38] sm:$0xf]
    %v172 = vld [vmem:[#allocation10 + $0x3c] sm:$0xf]
    %v173 = vld [vmem:[#allocation10 + $0x40] sm:$0xf]
    %v174 = vld [vmem:[#allocation10 + $0x44] sm:$0xf]
    %v175 = vld [vmem:[#allocation10 + $0x48] sm:$0xf]
    %v176 = vld [vmem:[#allocation10 + $0x4c] sm:$0xf]
    %v177 = vld [vmem:[#allocation10 + $0x50] sm:$0xf]
    %v178 = vld [vmem:[#allocation10 + $0x54] sm:$0xf]
    %v179 = vld [vmem:[#allocation10 + $0x58] sm:$0xf]
    %v180 = vld [vmem:[#allocation10 + $0x5c] sm:$0xf]
    %v181 = vld [vmem:[#allocation10 + $0x60] sm:$0xf]
    %v182 = vld [vmem:[#allocation10 + $0x64] sm:$0xf]
    %v183 = vld [vmem:[#allocation10 + $0x68] sm:$0xf]
    %v184 = vld [vmem:[#allocation10 + $0x6c] sm:$0xf]
    %v185 = vld [vmem:[#allocation10 + $0x70] sm:$0xf]
    %v186 = vld [vmem:[#allocation10 + $0x74] sm:$0xf]
    %v187 = vld [vmem:[#allocation10 + $0x78] sm:$0xf]
    %v188 = vld [vmem:[#allocation10 + $0x7c] sm:$0xf]
    %v189 = vld [vmem:[#allocation10 + $0x80] sm:$0xf]
    %v190 = vld [vmem:[#allocation10 + $0x84] sm:$0xf]
    %v191 = vld [vmem:[#allocation10 + $0x88] sm:$0xf]
    %v192 = vld [vmem:[#allocation10 + $0x8c] sm:$0xf]
    %v193 = vld [vmem:[#allocation10 + $0x90] sm:$0xf]
    %v194 = vld [vmem:[#allocation10 + $0x94] sm:$0xf]
    %v195 = vld [vmem:[#allocation10 + $0x98] sm:$0xf]
    %v196 = vld [vmem:[#allocation10 + $0x9c] sm:$0xf]
    %v197 = vld [vmem:[#allocation10 + $0xa0] sm:$0xf]
    %v198 = vld [vmem:[#allocation10 + $0xa4] sm:$0xf]
    %v199 = vld [vmem:[#allocation10 + $0xa8] sm:$0xf]
    %v200 = vld [vmem:[#allocation10 + $0xac] sm:$0xf]
    %v201 = vld [vmem:[#allocation10 + $0xb0] sm:$0xf]
    %v202 = vld [vmem:[#allocation10 + $0xb4] sm:$0xf]
    %v203 = vld [vmem:[#allocation10 + $0xb8] sm:$0xf]
    %v204 = vld [vmem:[#allocation10 + $0xbc] sm:$0xf]
    %v205 = vld [vmem:[#allocation10 + $0xc0] sm:$0xf]
    %v206 = vld [vmem:[#allocation10 + $0xc4] sm:$0xf]
    %v207 = vld [vmem:[#allocation10 + $0xc8] sm:$0xf]
    %v208 = vld [vmem:[#allocation10 + $0xcc] sm:$0xf]
    %v209 = vld [vmem:[#allocation10 + $0xd0] sm:$0xf]
    %v210 = vld [vmem:[#allocation10 + $0xd4] sm:$0xf]
    %v211 = vld [vmem:[#allocation10 + $0xd8] sm:$0xf]
    %v212 = vld [vmem:[#allocation10 + $0xdc] sm:$0xf]
    %v213 = vld [vmem:[#allocation10 + $0xe0] sm:$0xf]
    %v214 = vld [vmem:[#allocation10 + $0xe4] sm:$0xf]
    %v215 = vld [vmem:[#allocation10 + $0xe8] sm:$0xf]
    %v216 = vld [vmem:[#allocation10 + $0xec] sm:$0xf]
    %v217 = vld [vmem:[#allocation10 + $0xf0] sm:$0xf]
    %v218 = vld [vmem:[#allocation10 + $0xf4] sm:$0xf]
    %v219 = vld [vmem:[#allocation10 + $0xf8] sm:$0xf]
    %v220 = vld [vmem:[#allocation10 + $0xfc] sm:$0xf]
    %v221 = vld [vmem:[#allocation10 + $0x100] sm:$0xf]
    %v222 = vld [vmem:[#allocation10 + $0x104] sm:$0xf]
    %v223 = vld [vmem:[#allocation10 + $0x108] sm:$0xf]
    %v224 = vld [vmem:[#allocation10 + $0x10c] sm:$0xf]
    %v225 = vld [vmem:[#allocation10 + $0x110] sm:$0xf]
    %v226 = vld [vmem:[#allocation10 + $0x114] sm:$0xf]
    %v227 = vld [vmem:[#allocation10 + $0x118] sm:$0xf]
    %v228 = vld [vmem:[#allocation10 + $0x11c] sm:$0xf]
    %v229 = vld [vmem:[#allocation10 + $0x120] sm:$0xf]
    %v230 = vld [vmem:[#allocation10 + $0x124] sm:$0xf]
    %v231 = vld [vmem:[#allocation10 + $0x128] sm:$0xf]
    %v232 = vld [vmem:[#allocation10 + $0x12c] sm:$0xf]
    %v233 = vld [vmem:[#allocation10 + $0x130] sm:$0xf]
    %v234 = vld [vmem:[#allocation10 + $0x134] sm:$0xf]
    %v235 = vld [vmem:[#allocation10 + $0x138] sm:$0xf]
    %v236 = vld [vmem:[#allocation10 + $0x13c] sm:$0xf]
    %v237 = vld [vmem:[#allocation10 + $0x140] sm:$0xf]
    %v238 = vld [vmem:[#allocation10 + $0x144] sm:$0xf]
    %v239 = vld [vmem:[#allocation10 + $0x148] sm:$0xf]
    %v240 = vld [vmem:[#allocation10 + $0x14c] sm:$0xf]
    %v241 = vld [vmem:[#allocation10 + $0x150] sm:$0xf]
    %v242 = vld [vmem:[#allocation10 + $0x154] sm:$0xf]
    %v243 = vld [vmem:[#allocation10 + $0x158] sm:$0xf]
    %v244 = vld [vmem:[#allocation10 + $0x15c] sm:$0xf]
    %v245 = vld [vmem:[#allocation10 + $0x160] sm:$0xf]
    %v246 = vld [vmem:[#allocation10 + $0x164] sm:$0xf]
    %v247 = vld [vmem:[#allocation10 + $0x168] sm:$0xf]
    %v248 = vld [vmem:[#allocation10 + $0x16c] sm:$0xf]
    %v249 = vld [vmem:[#allocation10 + $0x170] sm:$0xf]
    %v250 = vld [vmem:[#allocation10 + $0x174] sm:$0xf]
    %v251 = vld [vmem:[#allocation10 + $0x178] sm:$0xf]
    %v252 = vld [vmem:[#allocation10 + $0x17c] sm:$0xf]
    %v253 = vld [vmem:[#allocation10 + $0x180] sm:$0xf]
    %v254 = vld [vmem:[#allocation10 + $0x184] sm:$0xf]
    %v255 = vld [vmem:[#allocation10 + $0x188] sm:$0xf]
    %v256 = vld [vmem:[#allocation10 + $0x18c] sm:$0xf]
    %v257 = vld [vmem:[#allocation10 + $0x190] sm:$0xf]
    %v258 = vld [vmem:[#allocation10 + $0x194] sm:$0xf]
    %v259 = vld [vmem:[#allocation10 + $0x198] sm:$0xf]
    %v260 = vld [vmem:[#allocation10 + $0x19c] sm:$0xf]
    %v261 = vld [vmem:[#allocation10 + $0x1a0] sm:$0xf]
    %v262 = vld [vmem:[#allocation10 + $0x1a4] sm:$0xf]
    %v263 = vld [vmem:[#allocation10 + $0x1a8] sm:$0xf]
    %v264 = vld [vmem:[#allocation10 + $0x1ac] sm:$0xf]
    %v265 = vld [vmem:[#allocation10 + $0x1b0] sm:$0xf]
    %v266 = vld [vmem:[#allocation10 + $0x1b4] sm:$0xf]
    %v267 = vld [vmem:[#allocation10 + $0x1b8] sm:$0xf]
    %v268 = vld [vmem:[#allocation10 + $0x1bc] sm:$0xf]
    %v269 = vld [vmem:[#allocation10 + $0x1c0] sm:$0xf]
    %v270 = vld [vmem:[#allocation10 + $0x1c4] sm:$0xf]
    %v271 = vld [vmem:[#allocation10 + $0x1c8] sm:$0xf]
    %v272 = vld [vmem:[#allocation10 + $0x1cc] sm:$0xf]
    %v273 = vld [vmem:[#allocation10 + $0x1d0] sm:$0xf]
    %v274 = vld [vmem:[#allocation10 + $0x1d4] sm:$0xf]
    %v275 = vld [vmem:[#allocation10 + $0x1d8] sm:$0xf]
    %v276 = vld [vmem:[#allocation10 + $0x1dc] sm:$0xf]
    %v277 = vld [vmem:[#allocation10 + $0x1e0] sm:$0xf]
    %v278 = vld [vmem:[#allocation10 + $0x1e4] sm:$0xf]
    %v279 = vld [vmem:[#allocation10 + $0x1e8] sm:$0xf]
    %v280 = vld [vmem:[#allocation10 + $0x1ec] sm:$0xf]
    %v281 = vld [vmem:[#allocation10 + $0x1f0] sm:$0xf]
    %v282 = vld [vmem:[#allocation10 + $0x1f4] sm:$0xf]
    %v283 = vld [vmem:[#allocation10 + $0x1f8] sm:$0xf]
    %v284 = vld [vmem:[#allocation10 + $0x1fc] sm:$0xf]
    %v413 = vunpack.c.l.b16 %v157
    %v414 = vunpack.c.l.b16 %v158
    %v415 = vunpack.c.l.b16 %v159
    %v416 = vunpack.c.l.b16 %v160
    %v417 = vunpack.c.l.b16 %v161
    %v418 = vunpack.c.l.b16 %v162
    %v419 = vunpack.c.l.b16 %v163
    %v420 = vunpack.c.l.b16 %v164
    %v421 = vunpack.c.l.b16 %v165
    %v422 = vunpack.c.l.b16 %v166
    %v423 = vunpack.c.l.b16 %v167
    %v424 = vunpack.c.l.b16 %v168
    %v425 = vunpack.c.l.b16 %v169
    %v426 = vunpack.c.l.b16 %v170
    %v427 = vunpack.c.l.b16 %v171
    %v428 = vunpack.c.l.b16 %v172
    %v429 = vunpack.c.l.b16 %v173
    %v430 = vunpack.c.l.b16 %v174
    %v431 = vunpack.c.l.b16 %v175
    %v432 = vunpack.c.l.b16 %v176
    %v433 = vunpack.c.l.b16 %v177
    %v434 = vunpack.c.l.b16 %v178
    %v435 = vunpack.c.l.b16 %v179
    %v436 = vunpack.c.l.b16 %v180
    %v437 = vunpack.c.l.b16 %v181
    %v438 = vunpack.c.l.b16 %v182
    %v439 = vunpack.c.l.b16 %v183
    %v440 = vunpack.c.l.b16 %v184
    %v441 = vunpack.c.l.b16 %v185
    %v442 = vunpack.c.l.b16 %v186
    %v443 = vunpack.c.l.b16 %v187
    %v444 = vunpack.c.l.b16 %v188
    %v445 = vunpack.c.l.b16 %v189
    %v446 = vunpack.c.l.b16 %v190
    %v447 = vunpack.c.l.b16 %v191
    %v448 = vunpack.c.l.b16 %v192
    %v449 = vunpack.c.l.b16 %v193
    %v450 = vunpack.c.l.b16 %v194
    %v451 = vunpack.c.l.b16 %v195
    %v452 = vunpack.c.l.b16 %v196
    %v453 = vunpack.c.l.b16 %v197
    %v454 = vunpack.c.l.b16 %v198
    %v455 = vunpack.c.l.b16 %v199
    %v456 = vunpack.c.l.b16 %v200
    %v457 = vunpack.c.l.b16 %v201
    %v458 = vunpack.c.l.b16 %v202
    %v459 = vunpack.c.l.b16 %v203
    %v460 = vunpack.c.l.b16 %v204
    %v461 = vunpack.c.l.b16 %v205
    %v462 = vunpack.c.l.b16 %v206
    %v463 = vunpack.c.l.b16 %v207
    %v464 = vunpack.c.l.b16 %v208
    %v465 = vunpack.c.l.b16 %v209
    %v466 = vunpack.c.l.b16 %v210
    %v467 = vunpack.c.l.b16 %v211
    %v468 = vunpack.c.l.b16 %v212
    %v469 = vunpack.c.l.b16 %v213
    %v470 = vunpack.c.l.b16 %v214
    %v471 = vunpack.c.l.b16 %v215
    %v472 = vunpack.c.l.b16 %v216
    %v473 = vunpack.c.l.b16 %v217
    %v474 = vunpack.c.l.b16 %v218
    %v475 = vunpack.c.l.b16 %v219
    %v476 = vunpack.c.l.b16 %v220
    %v477 = vunpack.c.l.b16 %v221
    %v478 = vunpack.c.l.b16 %v222
    %v479 = vunpack.c.l.b16 %v223
    %v480 = vunpack.c.l.b16 %v224
    %v481 = vunpack.c.l.b16 %v225
    %v482 = vunpack.c.l.b16 %v226
    %v483 = vunpack.c.l.b16 %v227
    %v484 = vunpack.c.l.b16 %v228
    %v485 = vunpack.c.l.b16 %v229
    %v486 = vunpack.c.l.b16 %v230
    %v487 = vunpack.c.l.b16 %v231
    %v488 = vunpack.c.l.b16 %v232
    %v489 = vunpack.c.l.b16 %v233
    %v490 = vunpack.c.l.b16 %v234
    %v491 = vunpack.c.l.b16 %v235
    %v492 = vunpack.c.l.b16 %v236
    %v493 = vunpack.c.l.b16 %v237
    %v494 = vunpack.c.l.b16 %v238
    %v495 = vunpack.c.l.b16 %v239
    %v496 = vunpack.c.l.b16 %v240
    %v497 = vunpack.c.l.b16 %v241
    %v498 = vunpack.c.l.b16 %v242
    %v499 = vunpack.c.l.b16 %v243
    %v500 = vunpack.c.l.b16 %v244
    %v501 = vunpack.c.l.b16 %v245
    %v502 = vunpack.c.l.b16 %v246
    %v503 = vunpack.c.l.b16 %v247
    %v504 = vunpack.c.l.b16 %v248
    %v505 = vunpack.c.l.b16 %v249
    %v506 = vunpack.c.l.b16 %v250
    %v507 = vunpack.c.l.b16 %v251
    %v508 = vunpack.c.l.b16 %v252
    %v509 = vunpack.c.l.b16 %v253
    %v510 = vunpack.c.l.b16 %v254
    %v511 = vunpack.c.l.b16 %v255
    %v512 = vunpack.c.l.b16 %v256
    %v513 = vunpack.c.l.b16 %v257
    %v514 = vunpack.c.l.b16 %v258
    %v515 = vunpack.c.l.b16 %v259
    %v516 = vunpack.c.l.b16 %v260
    %v517 = vunpack.c.l.b16 %v261
    %v518 = vunpack.c.l.b16 %v262
    %v519 = vunpack.c.l.b16 %v263
    %v520 = vunpack.c.l.b16 %v264
    %v521 = vunpack.c.l.b16 %v265
    %v522 = vunpack.c.l.b16 %v266
    %v523 = vunpack.c.l.b16 %v267
    %v524 = vunpack.c.l.b16 %v268
    %v525 = vunpack.c.l.b16 %v269
    %v526 = vunpack.c.l.b16 %v270
    %v527 = vunpack.c.l.b16 %v271
    %v528 = vunpack.c.l.b16 %v272
    %v529 = vunpack.c.l.b16 %v273
    %v530 = vunpack.c.l.b16 %v274
    %v531 = vunpack.c.l.b16 %v275
    %v532 = vunpack.c.l.b16 %v276
    %v533 = vunpack.c.l.b16 %v277
    %v534 = vunpack.c.l.b16 %v278
    %v535 = vunpack.c.l.b16 %v279
    %v536 = vunpack.c.l.b16 %v280
    %v537 = vunpack.c.l.b16 %v281
    %v538 = vunpack.c.l.b16 %v282
    %v539 = vunpack.c.l.b16 %v283
    %v540 = vunpack.c.l.b16 %v284
    %v541 = vpack.c.b16 %v414, %v413
    %v542 = vpack.c.b16 %v416, %v415
    %v543 = vpack.c.b16 %v418, %v417
    %v544 = vpack.c.b16 %v420, %v419
    %v545 = vpack.c.b16 %v422, %v421
    %v546 = vpack.c.b16 %v424, %v423
    %v547 = vpack.c.b16 %v426, %v425
    %v548 = vpack.c.b16 %v428, %v427
    %v549 = vpack.c.b16 %v430, %v429
    %v550 = vpack.c.b16 %v432, %v431
    %v551 = vpack.c.b16 %v434, %v433
    %v552 = vpack.c.b16 %v436, %v435
    %v553 = vpack.c.b16 %v438, %v437
    %v554 = vpack.c.b16 %v440, %v439
    %v555 = vpack.c.b16 %v442, %v441
    %v556 = vpack.c.b16 %v444, %v443
    %v557 = vpack.c.b16 %v446, %v445
    %v558 = vpack.c.b16 %v448, %v447
    %v559 = vpack.c.b16 %v450, %v449
    %v560 = vpack.c.b16 %v452, %v451
    %v561 = vpack.c.b16 %v454, %v453
    %v562 = vpack.c.b16 %v456, %v455
    %v563 = vpack.c.b16 %v458, %v457
    %v564 = vpack.c.b16 %v460, %v459
    %v565 = vpack.c.b16 %v462, %v461
    %v566 = vpack.c.b16 %v464, %v463
    %v567 = vpack.c.b16 %v466, %v465
    %v568 = vpack.c.b16 %v468, %v467
    %v569 = vpack.c.b16 %v470, %v469
    %v570 = vpack.c.b16 %v472, %v471
    %v571 = vpack.c.b16 %v474, %v473
    %v572 = vpack.c.b16 %v476, %v475
    %v573 = vpack.c.b16 %v478, %v477
    %v574 = vpack.c.b16 %v480, %v479
    %v575 = vpack.c.b16 %v482, %v481
    %v576 = vpack.c.b16 %v484, %v483
    %v577 = vpack.c.b16 %v486, %v485
    %v578 = vpack.c.b16 %v488, %v487
    %v579 = vpack.c.b16 %v490, %v489
    %v580 = vpack.c.b16 %v492, %v491
    %v581 = vpack.c.b16 %v494, %v493
    %v582 = vpack.c.b16 %v496, %v495
    %v583 = vpack.c.b16 %v498, %v497
    %v584 = vpack.c.b16 %v500, %v499
    %v585 = vpack.c.b16 %v502, %v501
    %v586 = vpack.c.b16 %v504, %v503
    %v587 = vpack.c.b16 %v506, %v505
    %v588 = vpack.c.b16 %v508, %v507
    %v589 = vpack.c.b16 %v510, %v509
    %v590 = vpack.c.b16 %v512, %v511
    %v591 = vpack.c.b16 %v514, %v513
    %v592 = vpack.c.b16 %v516, %v515
    %v593 = vpack.c.b16 %v518, %v517
    %v594 = vpack.c.b16 %v520, %v519
    %v595 = vpack.c.b16 %v522, %v521
    %v596 = vpack.c.b16 %v524, %v523
    %v597 = vpack.c.b16 %v526, %v525
    %v598 = vpack.c.b16 %v528, %v527
    %v599 = vpack.c.b16 %v530, %v529
    %v600 = vpack.c.b16 %v532, %v531
    %v601 = vpack.c.b16 %v534, %v533
    %v602 = vpack.c.b16 %v536, %v535
    %v603 = vpack.c.b16 %v538, %v537
    %v604 = vpack.c.b16 %v540, %v539
    %669 = vmatprep.subr.bf16.mxu0 0
    %670 = vmatpush1.bf16.msra.mxu0 %v548
    %671 = vmatprep.subr.bf16.mxu0 0
    %672 = vmatpush1.bf16.msra.mxu0 %v547
    %673 = vmatprep.subr.bf16.mxu0 0
    %674 = vmatpush1.bf16.msra.mxu0 %v546
    %675 = vmatprep.subr.bf16.mxu0 0
    %676 = vmatpush1.bf16.msra.mxu0 %v545
    %677 = vmatprep.subr.bf16.mxu0 0
    %678 = vmatpush1.bf16.msra.mxu0 %v544
    %679 = vmatprep.subr.bf16.mxu0 0
    %680 = vmatpush1.bf16.msra.mxu0 %v543
    %681 = vmatprep.subr.bf16.mxu0 0
    %682 = vmatpush1.bf16.msra.mxu0 %v542
    %683 = vmatprep.subr.bf16.mxu0 0
    %684 = vmatpush1.bf16.msra.mxu0 %v541
    %685 = vmatprep.subr.bf16.mxu0 0
    %686 = vmatpush2.bf16.msra.mxu0 %v556
    %687 = vmatprep.subr.bf16.mxu0 0
    %688 = vmatpush2.bf16.msra.mxu0 %v555
    %689 = vmatprep.subr.bf16.mxu0 0
    %690 = vmatpush2.bf16.msra.mxu0 %v554
    %691 = vmatprep.subr.bf16.mxu0 0
    %692 = vmatpush2.bf16.msra.mxu0 %v553
    %693 = vmatprep.subr.bf16.mxu0 0
    %694 = vmatpush2.bf16.msra.mxu0 %v552
    %695 = vmatprep.subr.bf16.mxu0 0
    %696 = vmatpush2.bf16.msra.mxu0 %v551
    %697 = vmatprep.subr.bf16.mxu0 0
    %698 = vmatpush2.bf16.msra.mxu0 %v550
    %699 = vmatprep.subr.bf16.mxu0 0
    %700 = vmatpush2.bf16.msra.mxu0 %v549
    %701 = vmatprep.mubr.bf16.mxu0 %v124
    %702 = vmatmul.mubr.bf16.gmra.mxu0 %v123
    %v703 = vpop.f32.mrf.mxu0
    %v704 = vadd.f32 0.0, %v703
    %v705 = vpop.f32.mrf.mxu0
    %v706 = vpop.f32.mrf.mxu0
    %v707 = vadd.f32 0.0, %v706
    %v708 = vpop.f32.mrf.mxu0
    %709 = vdwg.mxu0
    %710 = vmatprep.subr.bf16.mxu0 0
    %711 = vmatpush1.bf16.msra.mxu0 %v564
    %712 = vmatprep.subr.bf16.mxu0 0
    %713 = vmatpush1.bf16.msra.mxu0 %v563
    %714 = vmatprep.subr.bf16.mxu0 0
    %715 = vmatpush1.bf16.msra.mxu0 %v562
    %716 = vmatprep.subr.bf16.mxu0 0
    %717 = vmatpush1.bf16.msra.mxu0 %v561
    %718 = vmatprep.subr.bf16.mxu0 0
    %719 = vmatpush1.bf16.msra.mxu0 %v560
    %720 = vmatprep.subr.bf16.mxu0 0
    %721 = vmatpush1.bf16.msra.mxu0 %v559
    %722 = vmatprep.subr.bf16.mxu0 0
    %723 = vmatpush1.bf16.msra.mxu0 %v558
    %724 = vmatprep.subr.bf16.mxu0 0
    %725 = vmatpush1.bf16.msra.mxu0 %v557
    %726 = vmatprep.subr.bf16.mxu0 0
    %727 = vmatpush2.bf16.msra.mxu0 %v572
    %728 = vmatprep.subr.bf16.mxu0 0
    %729 = vmatpush2.bf16.msra.mxu0 %v571
    %730 = vmatprep.subr.bf16.mxu0 0
    %731 = vmatpush2.bf16.msra.mxu0 %v570
    %732 = vmatprep.subr.bf16.mxu0 0
    %733 = vmatpush2.bf16.msra.mxu0 %v569
    %734 = vmatprep.subr.bf16.mxu0 0
    %735 = vmatpush2.bf16.msra.mxu0 %v568
    %736 = vmatprep.subr.bf16.mxu0 0
    %737 = vmatpush2.bf16.msra.mxu0 %v567
    %738 = vmatprep.subr.bf16.mxu0 0
    %739 = vmatpush2.bf16.msra.mxu0 %v566
    %740 = vmatprep.subr.bf16.mxu0 0
    %741 = vmatpush2.bf16.msra.mxu0 %v565
    %742 = vmatprep.mubr.bf16.mxu0 %v126
    %743 = vmatmul.mubr.bf16.gmra.mxu0 %v125
    %v744 = vpop.f32.mrf.mxu0
    %v745 = vadd.f32 %v704, %v744
    %v746 = vpop.f32.mrf.mxu0
    %v747 = vpop.f32.mrf.mxu0
    %v748 = vadd.f32 %v707, %v747
    %v749 = vpop.f32.mrf.mxu0
    %750 = vdwg.mxu0
    %751 = vmatprep.subr.bf16.mxu0 0
    %752 = vmatpush1.bf16.msra.mxu0 %v580
    %753 = vmatprep.subr.bf16.mxu0 0
    %754 = vmatpush1.bf16.msra.mxu0 %v579
    %755 = vmatprep.subr.bf16.mxu0 0
    %756 = vmatpush1.bf16.msra.mxu0 %v578
    %757 = vmatprep.subr.bf16.mxu0 0
    %758 = vmatpush1.bf16.msra.mxu0 %v577
    %759 = vmatprep.subr.bf16.mxu0 0
    %760 = vmatpush1.bf16.msra.mxu0 %v576
    %761 = vmatprep.subr.bf16.mxu0 0
    %762 = vmatpush1.bf16.msra.mxu0 %v575
    %763 = vmatprep.subr.bf16.mxu0 0
    %764 = vmatpush1.bf16.msra.mxu0 %v574
    %765 = vmatprep.subr.bf16.mxu0 0
    %766 = vmatpush1.bf16.msra.mxu0 %v573
    %767 = vmatprep.subr.bf16.mxu0 0
    %768 = vmatpush2.bf16.msra.mxu0 %v588
    %769 = vmatprep.subr.bf16.mxu0 0
    %770 = vmatpush2.bf16.msra.mxu0 %v587
    %771 = vmatprep.subr.bf16.mxu0 0
    %772 = vmatpush2.bf16.msra.mxu0 %v586
    %773 = vmatprep.subr.bf16.mxu0 0
    %774 = vmatpush2.bf16.msra.mxu0 %v585
    %775 = vmatprep.subr.bf16.mxu0 0
    %776 = vmatpush2.bf16.msra.mxu0 %v584
    %777 = vmatprep.subr.bf16.mxu0 0
    %778 = vmatpush2.bf16.msra.mxu0 %v583
    %779 = vmatprep.subr.bf16.mxu0 0
    %780 = vmatpush2.bf16.msra.mxu0 %v582
    %781 = vmatprep.subr.bf16.mxu0 0
    %782 = vmatpush2.bf16.msra.mxu0 %v581
    %783 = vmatprep.mubr.bf16.mxu0 %v128
    %784 = vmatmul.mubr.bf16.gmra.mxu0 %v127
    %v785 = vpop.f32.mrf.mxu0
    %v786 = vadd.f32 %v745, %v785
    %v787 = vpop.f32.mrf.mxu0
    %v788 = vpop.f32.mrf.mxu0
    %v789 = vadd.f32 %v748, %v788
    %v790 = vpop.f32.mrf.mxu0
    %791 = vdwg.mxu0
    %792 = vmatprep.subr.bf16.mxu0 0
    %793 = vmatpush1.bf16.msra.mxu0 %v596
    %794 = vmatprep.subr.bf16.mxu0 0
    %795 = vmatpush1.bf16.msra.mxu0 %v595
    %796 = vmatprep.subr.bf16.mxu0 0
    %797 = vmatpush1.bf16.msra.mxu0 %v594
    %798 = vmatprep.subr.bf16.mxu0 0
    %799 = vmatpush1.bf16.msra.mxu0 %v593
    %800 = vmatprep.subr.bf16.mxu0 0
    %801 = vmatpush1.bf16.msra.mxu0 %v592
    %802 = vmatprep.subr.bf16.mxu0 0
    %803 = vmatpush1.bf16.msra.mxu0 %v591
    %804 = vmatprep.subr.bf16.mxu0 0
    %805 = vmatpush1.bf16.msra.mxu0 %v590
    %806 = vmatprep.subr.bf16.mxu0 0
    %807 = vmatpush1.bf16.msra.mxu0 %v589
    %808 = vmatprep.subr.bf16.mxu0 0
    %809 = vmatpush2.bf16.msra.mxu0 %v604
    %810 = vmatprep.subr.bf16.mxu0 0
    %811 = vmatpush2.bf16.msra.mxu0 %v603
    %812 = vmatprep.subr.bf16.mxu0 0
    %813 = vmatpush2.bf16.msra.mxu0 %v602
    %814 = vmatprep.subr.bf16.mxu0 0
    %815 = vmatpush2.bf16.msra.mxu0 %v601
    %816 = vmatprep.subr.bf16.mxu0 0
    %817 = vmatpush2.bf16.msra.mxu0 %v600
    %818 = vmatprep.subr.bf16.mxu0 0
    %819 = vmatpush2.bf16.msra.mxu0 %v599
    %820 = vmatprep.subr.bf16.mxu0 0
    %821 = vmatpush2.bf16.msra.mxu0 %v598
    %822 = vmatprep.subr.bf16.mxu0 0
    %823 = vmatpush2.bf16.msra.mxu0 %v597
    %824 = vmatprep.mubr.bf16.mxu0 %v130
    %825 = vmatmul.mubr.bf16.gmra.mxu0 %v129
    %v826 = vpop.f32.mrf.mxu0
    %v827 = vadd.f32 %v786, %v826
    %v828 = vpop.f32.mrf.mxu0
    %v829 = vpop.f32.mrf.mxu0
    %v830 = vadd.f32 %v789, %v829
    %v831 = vpop.f32.mrf.mxu0
    %832 = vdwg.mxu0
    %v833 = vadd.f32 %v155, %v827
    %v834 = vadd.f32 %v156, %v830
    %835 = vst [vmem:[#allocation2] sm:$0xff] %v833
    %836 = vst [vmem:[#allocation2 + $0x8] sm:$0xff] %v834
    %v837 = vld [vmem:[#allocation3] sm:$0xff]
    %v838 = vld [vmem:[#allocation3 + $0x8] sm:$0xff]
    %v839 = vld [vmem:[#allocation11] sm:$0xf]
    %v840 = vld [vmem:[#allocation11 + $0x4] sm:$0xf]
    %v841 = vld [vmem:[#allocation11 + $0x8] sm:$0xf]
    %v842 = vld [vmem:[#allocation11 + $0xc] sm:$0xf]
    %v843 = vld [vmem:[#allocation11 + $0x10] sm:$0xf]
    %v844 = vld [vmem:[#allocation11 + $0x14] sm:$0xf]
    %v845 = vld [vmem:[#allocation11 + $0x18] sm:$0xf]
    %v846 = vld [vmem:[#allocation11 + $0x1c] sm:$0xf]
    %v847 = vld [vmem:[#allocation11 + $0x20] sm:$0xf]
    %v848 = vld [vmem:[#allocation11 + $0x24] sm:$0xf]
    %v849 = vld [vmem:[#allocation11 + $0x28] sm:$0xf]
    %v850 = vld [vmem:[#allocation11 + $0x2c] sm:$0xf]
    %v851 = vld [vmem:[#allocation11 + $0x30] sm:$0xf]
    %v852 = vld [vmem:[#allocation11 + $0x34] sm:$0xf]
    %v853 = vld [vmem:[#allocation11 + $0x38] sm:$0xf]
    %v854 = vld [vmem:[#allocation11 + $0x3c] sm:$0xf]
    %v855 = vld [vmem:[#allocation11 + $0x40] sm:$0xf]
    %v856 = vld [vmem:[#allocation11 + $0x44] sm:$0xf]
    %v857 = vld [vmem:[#allocation11 + $0x48] sm:$0xf]
    %v858 = vld [vmem:[#allocation11 + $0x4c] sm:$0xf]
    %v859 = vld [vmem:[#allocation11 + $0x50] sm:$0xf]
    %v860 = vld [vmem:[#allocation11 + $0x54] sm:$0xf]
    %v861 = vld [vmem:[#allocation11 + $0x58] sm:$0xf]
    %v862 = vld [vmem:[#allocation11 + $0x5c] sm:$0xf]
    %v863 = vld [vmem:[#allocation11 + $0x60] sm:$0xf]
    %v864 = vld [vmem:[#allocation11 + $0x64] sm:$0xf]
    %v865 = vld [vmem:[#allocation11 + $0x68] sm:$0xf]
    %v866 = vld [vmem:[#allocation11 + $0x6c] sm:$0xf]
    %v867 = vld [vmem:[#allocation11 + $0x70] sm:$0xf]
    %v868 = vld [vmem:[#allocation11 + $0x74] sm:$0xf]
    %v869 = vld [vmem:[#allocation11 + $0x78] sm:$0xf]
    %v870 = vld [vmem:[#allocation11 + $0x7c] sm:$0xf]
    %v871 = vld [vmem:[#allocation11 + $0x80] sm:$0xf]
    %v872 = vld [vmem:[#allocation11 + $0x84] sm:$0xf]
    %v873 = vld [vmem:[#allocation11 + $0x88] sm:$0xf]
    %v874 = vld [vmem:[#allocation11 + $0x8c] sm:$0xf]
    %v875 = vld [vmem:[#allocation11 + $0x90] sm:$0xf]
    %v876 = vld [vmem:[#allocation11 + $0x94] sm:$0xf]
    %v877 = vld [vmem:[#allocation11 + $0x98] sm:$0xf]
    %v878 = vld [vmem:[#allocation11 + $0x9c] sm:$0xf]
    %v879 = vld [vmem:[#allocation11 + $0xa0] sm:$0xf]
    %v880 = vld [vmem:[#allocation11 + $0xa4] sm:$0xf]
    %v881 = vld [vmem:[#allocation11 + $0xa8] sm:$0xf]
    %v882 = vld [vmem:[#allocation11 + $0xac] sm:$0xf]
    %v883 = vld [vmem:[#allocation11 + $0xb0] sm:$0xf]
    %v884 = vld [vmem:[#allocation11 + $0xb4] sm:$0xf]
    %v885 = vld [vmem:[#allocation11 + $0xb8] sm:$0xf]
    %v886 = vld [vmem:[#allocation11 + $0xbc] sm:$0xf]
    %v887 = vld [vmem:[#allocation11 + $0xc0] sm:$0xf]
    %v888 = vld [vmem:[#allocation11 + $0xc4] sm:$0xf]
    %v889 = vld [vmem:[#allocation11 + $0xc8] sm:$0xf]
    %v890 = vld [vmem:[#allocation11 + $0xcc] sm:$0xf]
    %v891 = vld [vmem:[#allocation11 + $0xd0] sm:$0xf]
    %v892 = vld [vmem:[#allocation11 + $0xd4] sm:$0xf]
    %v893 = vld [vmem:[#allocation11 + $0xd8] sm:$0xf]
    %v894 = vld [vmem:[#allocation11 + $0xdc] sm:$0xf]
    %v895 = vld [vmem:[#allocation11 + $0xe0] sm:$0xf]
    %v896 = vld [vmem:[#allocation11 + $0xe4] sm:$0xf]
    %v897 = vld [vmem:[#allocation11 + $0xe8] sm:$0xf]
    %v898 = vld [vmem:[#allocation11 + $0xec] sm:$0xf]
    %v899 = vld [vmem:[#allocation11 + $0xf0] sm:$0xf]
    %v900 = vld [vmem:[#allocation11 + $0xf4] sm:$0xf]
    %v901 = vld [vmem:[#allocation11 + $0xf8] sm:$0xf]
    %v902 = vld [vmem:[#allocation11 + $0xfc] sm:$0xf]
    %v903 = vld [vmem:[#allocation11 + $0x100] sm:$0xf]
    %v904 = vld [vmem:[#allocation11 + $0x104] sm:$0xf]
    %v905 = vld [vmem:[#allocation11 + $0x108] sm:$0xf]
    %v906 = vld [vmem:[#allocation11 + $0x10c] sm:$0xf]
    %v907 = vld [vmem:[#allocation11 + $0x110] sm:$0xf]
    %v908 = vld [vmem:[#allocation11 + $0x114] sm:$0xf]
    %v909 = vld [vmem:[#allocation11 + $0x118] sm:$0xf]
    %v910 = vld [vmem:[#allocation11 + $0x11c] sm:$0xf]
    %v911 = vld [vmem:[#allocation11 + $0x120] sm:$0xf]
    %v912 = vld [vmem:[#allocation11 + $0x124] sm:$0xf]
    %v913 = vld [vmem:[#allocation11 + $0x128] sm:$0xf]
    %v914 = vld [vmem:[#allocation11 + $0x12c] sm:$0xf]
    %v915 = vld [vmem:[#allocation11 + $0x130] sm:$0xf]
    %v916 = vld [vmem:[#allocation11 + $0x134] sm:$0xf]
    %v917 = vld [vmem:[#allocation11 + $0x138] sm:$0xf]
    %v918 = vld [vmem:[#allocation11 + $0x13c] sm:$0xf]
    %v919 = vld [vmem:[#allocation11 + $0x140] sm:$0xf]
    %v920 = vld [vmem:[#allocation11 + $0x144] sm:$0xf]
    %v921 = vld [vmem:[#allocation11 + $0x148] sm:$0xf]
    %v922 = vld [vmem:[#allocation11 + $0x14c] sm:$0xf]
    %v923 = vld [vmem:[#allocation11 + $0x150] sm:$0xf]
    %v924 = vld [vmem:[#allocation11 + $0x154] sm:$0xf]
    %v925 = vld [vmem:[#allocation11 + $0x158] sm:$0xf]
    %v926 = vld [vmem:[#allocation11 + $0x15c] sm:$0xf]
    %v927 = vld [vmem:[#allocation11 + $0x160] sm:$0xf]
    %v928 = vld [vmem:[#allocation11 + $0x164] sm:$0xf]
    %v929 = vld [vmem:[#allocation11 + $0x168] sm:$0xf]
    %v930 = vld [vmem:[#allocation11 + $0x16c] sm:$0xf]
    %v931 = vld [vmem:[#allocation11 + $0x170] sm:$0xf]
    %v932 = vld [vmem:[#allocation11 + $0x174] sm:$0xf]
    %v933 = vld [vmem:[#allocation11 + $0x178] sm:$0xf]
    %v934 = vld [vmem:[#allocation11 + $0x17c] sm:$0xf]
    %v935 = vld [vmem:[#allocation11 + $0x180] sm:$0xf]
    %v936 = vld [vmem:[#allocation11 + $0x184] sm:$0xf]
    %v937 = vld [vmem:[#allocation11 + $0x188] sm:$0xf]
    %v938 = vld [vmem:[#allocation11 + $0x18c] sm:$0xf]
    %v939 = vld [vmem:[#allocation11 + $0x190] sm:$0xf]
    %v940 = vld [vmem:[#allocation11 + $0x194] sm:$0xf]
    %v941 = vld [vmem:[#allocation11 + $0x198] sm:$0xf]
    %v942 = vld [vmem:[#allocation11 + $0x19c] sm:$0xf]
    %v943 = vld [vmem:[#allocation11 + $0x1a0] sm:$0xf]
    %v944 = vld [vmem:[#allocation11 + $0x1a4] sm:$0xf]
    %v945 = vld [vmem:[#allocation11 + $0x1a8] sm:$0xf]
    %v946 = vld [vmem:[#allocation11 + $0x1ac] sm:$0xf]
    %v947 = vld [vmem:[#allocation11 + $0x1b0] sm:$0xf]
    %v948 = vld [vmem:[#allocation11 + $0x1b4] sm:$0xf]
    %v949 = vld [vmem:[#allocation11 + $0x1b8] sm:$0xf]
    %v950 = vld [vmem:[#allocation11 + $0x1bc] sm:$0xf]
    %v951 = vld [vmem:[#allocation11 + $0x1c0] sm:$0xf]
    %v952 = vld [vmem:[#allocation11 + $0x1c4] sm:$0xf]
    %v953 = vld [vmem:[#allocation11 + $0x1c8] sm:$0xf]
    %v954 = vld [vmem:[#allocation11 + $0x1cc] sm:$0xf]
    %v955 = vld [vmem:[#allocation11 + $0x1d0] sm:$0xf]
    %v956 = vld [vmem:[#allocation11 + $0x1d4] sm:$0xf]
    %v957 = vld [vmem:[#allocation11 + $0x1d8] sm:$0xf]
    %v958 = vld [vmem:[#allocation11 + $0x1dc] sm:$0xf]
    %v959 = vld [vmem:[#allocation11 + $0x1e0] sm:$0xf]
    %v960 = vld [vmem:[#allocation11 + $0x1e4] sm:$0xf]
    %v961 = vld [vmem:[#allocation11 + $0x1e8] sm:$0xf]
    %v962 = vld [vmem:[#allocation11 + $0x1ec] sm:$0xf]
    %v963 = vld [vmem:[#allocation11 + $0x1f0] sm:$0xf]
    %v964 = vld [vmem:[#allocation11 + $0x1f4] sm:$0xf]
    %v965 = vld [vmem:[#allocation11 + $0x1f8] sm:$0xf]
    %v966 = vld [vmem:[#allocation11 + $0x1fc] sm:$0xf]
    %v1095 = vunpack.c.l.b16 %v839
    %v1096 = vunpack.c.l.b16 %v840
    %v1097 = vunpack.c.l.b16 %v841
    %v1098 = vunpack.c.l.b16 %v842
    %v1099 = vunpack.c.l.b16 %v843
    %v1100 = vunpack.c.l.b16 %v844
    %v1101 = vunpack.c.l.b16 %v845
    %v1102 = vunpack.c.l.b16 %v846
    %v1103 = vunpack.c.l.b16 %v847
    %v1104 = vunpack.c.l.b16 %v848
    %v1105 = vunpack.c.l.b16 %v849
    %v1106 = vunpack.c.l.b16 %v850
    %v1107 = vunpack.c.l.b16 %v851
    %v1108 = vunpack.c.l.b16 %v852
    %v1109 = vunpack.c.l.b16 %v853
    %v1110 = vunpack.c.l.b16 %v854
    %v1111 = vunpack.c.l.b16 %v855
    %v1112 = vunpack.c.l.b16 %v856
    %v1113 = vunpack.c.l.b16 %v857
    %v1114 = vunpack.c.l.b16 %v858
    %v1115 = vunpack.c.l.b16 %v859
    %v1116 = vunpack.c.l.b16 %v860
    %v1117 = vunpack.c.l.b16 %v861
    %v1118 = vunpack.c.l.b16 %v862
    %v1119 = vunpack.c.l.b16 %v863
    %v1120 = vunpack.c.l.b16 %v864
    %v1121 = vunpack.c.l.b16 %v865
    %v1122 = vunpack.c.l.b16 %v866
    %v1123 = vunpack.c.l.b16 %v867
    %v1124 = vunpack.c.l.b16 %v868
    %v1125 = vunpack.c.l.b16 %v869
    %v1126 = vunpack.c.l.b16 %v870
    %v1127 = vunpack.c.l.b16 %v871
    %v1128 = vunpack.c.l.b16 %v872
    %v1129 = vunpack.c.l.b16 %v873
    %v1130 = vunpack.c.l.b16 %v874
    %v1131 = vunpack.c.l.b16 %v875
    %v1132 = vunpack.c.l.b16 %v876
    %v1133 = vunpack.c.l.b16 %v877
    %v1134 = vunpack.c.l.b16 %v878
    %v1135 = vunpack.c.l.b16 %v879
    %v1136 = vunpack.c.l.b16 %v880
    %v1137 = vunpack.c.l.b16 %v881
    %v1138 = vunpack.c.l.b16 %v882
    %v1139 = vunpack.c.l.b16 %v883
    %v1140 = vunpack.c.l.b16 %v884
    %v1141 = vunpack.c.l.b16 %v885
    %v1142 = vunpack.c.l.b16 %v886
    %v1143 = vunpack.c.l.b16 %v887
    %v1144 = vunpack.c.l.b16 %v888
    %v1145 = vunpack.c.l.b16 %v889
    %v1146 = vunpack.c.l.b16 %v890
    %v1147 = vunpack.c.l.b16 %v891
    %v1148 = vunpack.c.l.b16 %v892
    %v1149 = vunpack.c.l.b16 %v893
    %v1150 = vunpack.c.l.b16 %v894
    %v1151 = vunpack.c.l.b16 %v895
    %v1152 = vunpack.c.l.b16 %v896
    %v1153 = vunpack.c.l.b16 %v897
    %v1154 = vunpack.c.l.b16 %v898
    %v1155 = vunpack.c.l.b16 %v899
    %v1156 = vunpack.c.l.b16 %v900
    %v1157 = vunpack.c.l.b16 %v901
    %v1158 = vunpack.c.l.b16 %v902
    %v1159 = vunpack.c.l.b16 %v903
    %v1160 = vunpack.c.l.b16 %v904
    %v1161 = vunpack.c.l.b16 %v905
    %v1162 = vunpack.c.l.b16 %v906
    %v1163 = vunpack.c.l.b16 %v907
    %v1164 = vunpack.c.l.b16 %v908
    %v1165 = vunpack.c.l.b16 %v909
    %v1166 = vunpack.c.l.b16 %v910
    %v1167 = vunpack.c.l.b16 %v911
    %v1168 = vunpack.c.l.b16 %v912
    %v1169 = vunpack.c.l.b16 %v913
    %v1170 = vunpack.c.l.b16 %v914
    %v1171 = vunpack.c.l.b16 %v915
    %v1172 = vunpack.c.l.b16 %v916
    %v1173 = vunpack.c.l.b16 %v917
    %v1174 = vunpack.c.l.b16 %v918
    %v1175 = vunpack.c.l.b16 %v919
    %v1176 = vunpack.c.l.b16 %v920
    %v1177 = vunpack.c.l.b16 %v921
    %v1178 = vunpack.c.l.b16 %v922
    %v1179 = vunpack.c.l.b16 %v923
    %v1180 = vunpack.c.l.b16 %v924
    %v1181 = vunpack.c.l.b16 %v925
    %v1182 = vunpack.c.l.b16 %v926
    %v1183 = vunpack.c.l.b16 %v927
    %v1184 = vunpack.c.l.b16 %v928
    %v1185 = vunpack.c.l.b16 %v929
    %v1186 = vunpack.c.l.b16 %v930
    %v1187 = vunpack.c.l.b16 %v931
    %v1188 = vunpack.c.l.b16 %v932
    %v1189 = vunpack.c.l.b16 %v933
    %v1190 = vunpack.c.l.b16 %v934
    %v1191 = vunpack.c.l.b16 %v935
    %v1192 = vunpack.c.l.b16 %v936
    %v1193 = vunpack.c.l.b16 %v937
    %v1194 = vunpack.c.l.b16 %v938
    %v1195 = vunpack.c.l.b16 %v939
    %v1196 = vunpack.c.l.b16 %v940
    %v1197 = vunpack.c.l.b16 %v941
    %v1198 = vunpack.c.l.b16 %v942
    %v1199 = vunpack.c.l.b16 %v943
    %v1200 = vunpack.c.l.b16 %v944
    %v1201 = vunpack.c.l.b16 %v945
    %v1202 = vunpack.c.l.b16 %v946
    %v1203 = vunpack.c.l.b16 %v947
    %v1204 = vunpack.c.l.b16 %v948
    %v1205 = vunpack.c.l.b16 %v949
    %v1206 = vunpack.c.l.b16 %v950
    %v1207 = vunpack.c.l.b16 %v951
    %v1208 = vunpack.c.l.b16 %v952
    %v1209 = vunpack.c.l.b16 %v953
    %v1210 = vunpack.c.l.b16 %v954
    %v1211 = vunpack.c.l.b16 %v955
    %v1212 = vunpack.c.l.b16 %v956
    %v1213 = vunpack.c.l.b16 %v957
    %v1214 = vunpack.c.l.b16 %v958
    %v1215 = vunpack.c.l.b16 %v959
    %v1216 = vunpack.c.l.b16 %v960
    %v1217 = vunpack.c.l.b16 %v961
    %v1218 = vunpack.c.l.b16 %v962
    %v1219 = vunpack.c.l.b16 %v963
    %v1220 = vunpack.c.l.b16 %v964
    %v1221 = vunpack.c.l.b16 %v965
    %v1222 = vunpack.c.l.b16 %v966
    %v1223 = vpack.c.b16 %v1096, %v1095
    %v1224 = vpack.c.b16 %v1098, %v1097
    %v1225 = vpack.c.b16 %v1100, %v1099
    %v1226 = vpack.c.b16 %v1102, %v1101
    %v1227 = vpack.c.b16 %v1104, %v1103
    %v1228 = vpack.c.b16 %v1106, %v1105
    %v1229 = vpack.c.b16 %v1108, %v1107
    %v1230 = vpack.c.b16 %v1110, %v1109
    %v1231 = vpack.c.b16 %v1112, %v1111
    %v1232 = vpack.c.b16 %v1114, %v1113
    %v1233 = vpack.c.b16 %v1116, %v1115
    %v1234 = vpack.c.b16 %v1118, %v1117
    %v1235 = vpack.c.b16 %v1120, %v1119
    %v1236 = vpack.c.b16 %v1122, %v1121
    %v1237 = vpack.c.b16 %v1124, %v1123
    %v1238 = vpack.c.b16 %v1126, %v1125
    %v1239 = vpack.c.b16 %v1128, %v1127
    %v1240 = vpack.c.b16 %v1130, %v1129
    %v1241 = vpack.c.b16 %v1132, %v1131
    %v1242 = vpack.c.b16 %v1134, %v1133
    %v1243 = vpack.c.b16 %v1136, %v1135
    %v1244 = vpack.c.b16 %v1138, %v1137
    %v1245 = vpack.c.b16 %v1140, %v1139
    %v1246 = vpack.c.b16 %v1142, %v1141
    %v1247 = vpack.c.b16 %v1144, %v1143
    %v1248 = vpack.c.b16 %v1146, %v1145
    %v1249 = vpack.c.b16 %v1148, %v1147
    %v1250 = vpack.c.b16 %v1150, %v1149
    %v1251 = vpack.c.b16 %v1152, %v1151
    %v1252 = vpack.c.b16 %v1154, %v1153
    %v1253 = vpack.c.b16 %v1156, %v1155
    %v1254 = vpack.c.b16 %v1158, %v1157
    %v1255 = vpack.c.b16 %v1160, %v1159
    %v1256 = vpack.c.b16 %v1162, %v1161
    %v1257 = vpack.c.b16 %v1164, %v1163
    %v1258 = vpack.c.b16 %v1166, %v1165
    %v1259 = vpack.c.b16 %v1168, %v1167
    %v1260 = vpack.c.b16 %v1170, %v1169
    %v1261 = vpack.c.b16 %v1172, %v1171
    %v1262 = vpack.c.b16 %v1174, %v1173
    %v1263 = vpack.c.b16 %v1176, %v1175
    %v1264 = vpack.c.b16 %v1178, %v1177
    %v1265 = vpack.c.b16 %v1180, %v1179
    %v1266 = vpack.c.b16 %v1182, %v1181
    %v1267 = vpack.c.b16 %v1184, %v1183
    %v1268 = vpack.c.b16 %v1186, %v1185
    %v1269 = vpack.c.b16 %v1188, %v1187
    %v1270 = vpack.c.b16 %v1190, %v1189
    %v1271 = vpack.c.b16 %v1192, %v1191
    %v1272 = vpack.c.b16 %v1194, %v1193
    %v1273 = vpack.c.b16 %v1196, %v1195
    %v1274 = vpack.c.b16 %v1198, %v1197
    %v1275 = vpack.c.b16 %v1200, %v1199
    %v1276 = vpack.c.b16 %v1202, %v1201
    %v1277 = vpack.c.b16 %v1204, %v1203
    %v1278 = vpack.c.b16 %v1206, %v1205
    %v1279 = vpack.c.b16 %v1208, %v1207
    %v1280 = vpack.c.b16 %v1210, %v1209
    %v1281 = vpack.c.b16 %v1212, %v1211
    %v1282 = vpack.c.b16 %v1214, %v1213
    %v1283 = vpack.c.b16 %v1216, %v1215
    %v1284 = vpack.c.b16 %v1218, %v1217
    %v1285 = vpack.c.b16 %v1220, %v1219
    %v1286 = vpack.c.b16 %v1222, %v1221
    %1351 = vmatprep.subr.bf16.mxu0 0
    %1352 = vmatpush1.bf16.msra.mxu0 %v1230
    %1353 = vmatprep.subr.bf16.mxu0 0
    %1354 = vmatpush1.bf16.msra.mxu0 %v1229
    %1355 = vmatprep.subr.bf16.mxu0 0
    %1356 = vmatpush1.bf16.msra.mxu0 %v1228
    %1357 = vmatprep.subr.bf16.mxu0 0
    %1358 = vmatpush1.bf16.msra.mxu0 %v1227
    %1359 = vmatprep.subr.bf16.mxu0 0
    %1360 = vmatpush1.bf16.msra.mxu0 %v1226
    %1361 = vmatprep.subr.bf16.mxu0 0
    %1362 = vmatpush1.bf16.msra.mxu0 %v1225
    %1363 = vmatprep.subr.bf16.mxu0 0
    %1364 = vmatpush1.bf16.msra.mxu0 %v1224
    %1365 = vmatprep.subr.bf16.mxu0 0
    %1366 = vmatpush1.bf16.msra.mxu0 %v1223
    %1367 = vmatprep.subr.bf16.mxu0 0
    %1368 = vmatpush2.bf16.msra.mxu0 %v1238
    %1369 = vmatprep.subr.bf16.mxu0 0
    %1370 = vmatpush2.bf16.msra.mxu0 %v1237
    %1371 = vmatprep.subr.bf16.mxu0 0
    %1372 = vmatpush2.bf16.msra.mxu0 %v1236
    %1373 = vmatprep.subr.bf16.mxu0 0
    %1374 = vmatpush2.bf16.msra.mxu0 %v1235
    %1375 = vmatprep.subr.bf16.mxu0 0
    %1376 = vmatpush2.bf16.msra.mxu0 %v1234
    %1377 = vmatprep.subr.bf16.mxu0 0
    %1378 = vmatpush2.bf16.msra.mxu0 %v1233
    %1379 = vmatprep.subr.bf16.mxu0 0
    %1380 = vmatpush2.bf16.msra.mxu0 %v1232
    %1381 = vmatprep.subr.bf16.mxu0 0
    %1382 = vmatpush2.bf16.msra.mxu0 %v1231
    %1383 = vmatprep.mubr.bf16.mxu0 %v148
    %1384 = vmatmul.mubr.bf16.gmra.mxu0 %v147
    %v1385 = vpop.f32.mrf.mxu0
    %v1386 = vadd.f32 0.0, %v1385
    %v1387 = vpop.f32.mrf.mxu0
    %v1388 = vpop.f32.mrf.mxu0
    %v1389 = vadd.f32 0.0, %v1388
    %v1390 = vpop.f32.mrf.mxu0
    %1391 = vdwg.mxu0
    %1392 = vmatprep.subr.bf16.mxu0 0
    %1393 = vmatpush1.bf16.msra.mxu0 %v1246
    %1394 = vmatprep.subr.bf16.mxu0 0
    %1395 = vmatpush1.bf16.msra.mxu0 %v1245
    %1396 = vmatprep.subr.bf16.mxu0 0
    %1397 = vmatpush1.bf16.msra.mxu0 %v1244
    %1398 = vmatprep.subr.bf16.mxu0 0
    %1399 = vmatpush1.bf16.msra.mxu0 %v1243
    %1400 = vmatprep.subr.bf16.mxu0 0
    %1401 = vmatpush1.bf16.msra.mxu0 %v1242
    %1402 = vmatprep.subr.bf16.mxu0 0
    %1403 = vmatpush1.bf16.msra.mxu0 %v1241
    %1404 = vmatprep.subr.bf16.mxu0 0
    %1405 = vmatpush1.bf16.msra.mxu0 %v1240
    %1406 = vmatprep.subr.bf16.mxu0 0
    %1407 = vmatpush1.bf16.msra.mxu0 %v1239
    %1408 = vmatprep.subr.bf16.mxu0 0
    %1409 = vmatpush2.bf16.msra.mxu0 %v1254
    %1410 = vmatprep.subr.bf16.mxu0 0
    %1411 = vmatpush2.bf16.msra.mxu0 %v1253
    %1412 = vmatprep.subr.bf16.mxu0 0
    %1413 = vmatpush2.bf16.msra.mxu0 %v1252
    %1414 = vmatprep.subr.bf16.mxu0 0
    %1415 = vmatpush2.bf16.msra.mxu0 %v1251
    %1416 = vmatprep.subr.bf16.mxu0 0
    %1417 = vmatpush2.bf16.msra.mxu0 %v1250
    %1418 = vmatprep.subr.bf16.mxu0 0
    %1419 = vmatpush2.bf16.msra.mxu0 %v1249
    %1420 = vmatprep.subr.bf16.mxu0 0
    %1421 = vmatpush2.bf16.msra.mxu0 %v1248
    %1422 = vmatprep.subr.bf16.mxu0 0
    %1423 = vmatpush2.bf16.msra.mxu0 %v1247
    %1424 = vmatprep.mubr.bf16.mxu0 %v150
    %1425 = vmatmul.mubr.bf16.gmra.mxu0 %v149
    %v1426 = vpop.f32.mrf.mxu0
    %v1427 = vadd.f32 %v1386, %v1426
    %v1428 = vpop.f32.mrf.mxu0
    %v1429 = vpop.f32.mrf.mxu0
    %v1430 = vadd.f32 %v1389, %v1429
    %v1431 = vpop.f32.mrf.mxu0
    %1432 = vdwg.mxu0
    %1433 = vmatprep.subr.bf16.mxu0 0
    %1434 = vmatpush1.bf16.msra.mxu0 %v1262
    %1435 = vmatprep.subr.bf16.mxu0 0
    %1436 = vmatpush1.bf16.msra.mxu0 %v1261
    %1437 = vmatprep.subr.bf16.mxu0 0
    %1438 = vmatpush1.bf16.msra.mxu0 %v1260
    %1439 = vmatprep.subr.bf16.mxu0 0
    %1440 = vmatpush1.bf16.msra.mxu0 %v1259
    %1441 = vmatprep.subr.bf16.mxu0 0
    %1442 = vmatpush1.bf16.msra.mxu0 %v1258
    %1443 = vmatprep.subr.bf16.mxu0 0
    %1444 = vmatpush1.bf16.msra.mxu0 %v1257
    %1445 = vmatprep.subr.bf16.mxu0 0
    %1446 = vmatpush1.bf16.msra.mxu0 %v1256
    %1447 = vmatprep.subr.bf16.mxu0 0
    %1448 = vmatpush1.bf16.msra.mxu0 %v1255
    %1449 = vmatprep.subr.bf16.mxu0 0
    %1450 = vmatpush2.bf16.msra.mxu0 %v1270
    %1451 = vmatprep.subr.bf16.mxu0 0
    %1452 = vmatpush2.bf16.msra.mxu0 %v1269
    %1453 = vmatprep.subr.bf16.mxu0 0
    %1454 = vmatpush2.bf16.msra.mxu0 %v1268
    %1455 = vmatprep.subr.bf16.mxu0 0
    %1456 = vmatpush2.bf16.msra.mxu0 %v1267
    %1457 = vmatprep.subr.bf16.mxu0 0
    %1458 = vmatpush2.bf16.msra.mxu0 %v1266
    %1459 = vmatprep.subr.bf16.mxu0 0
    %1460 = vmatpush2.bf16.msra.mxu0 %v1265
    %1461 = vmatprep.subr.bf16.mxu0 0
    %1462 = vmatpush2.bf16.msra.mxu0 %v1264
    %1463 = vmatprep.subr.bf16.mxu0 0
    %1464 = vmatpush2.bf16.msra.mxu0 %v1263
    %1465 = vmatprep.mubr.bf16.mxu0 %v152
    %1466 = vmatmul.mubr.bf16.gmra.mxu0 %v151
    %v1467 = vpop.f32.mrf.mxu0
    %v1468 = vadd.f32 %v1427, %v1467
    %v1469 = vpop.f32.mrf.mxu0
    %v1470 = vpop.f32.mrf.mxu0
    %v1471 = vadd.f32 %v1430, %v1470
    %v1472 = vpop.f32.mrf.mxu0
    %1473 = vdwg.mxu0
    %1474 = vmatprep.subr.bf16.mxu0 0
    %1475 = vmatpush1.bf16.msra.mxu0 %v1278
    %1476 = vmatprep.subr.bf16.mxu0 0
    %1477 = vmatpush1.bf16.msra.mxu0 %v1277
    %1478 = vmatprep.subr.bf16.mxu0 0
    %1479 = vmatpush1.bf16.msra.mxu0 %v1276
    %1480 = vmatprep.subr.bf16.mxu0 0
    %1481 = vmatpush1.bf16.msra.mxu0 %v1275
    %1482 = vmatprep.subr.bf16.mxu0 0
    %1483 = vmatpush1.bf16.msra.mxu0 %v1274
    %1484 = vmatprep.subr.bf16.mxu0 0
    %1485 = vmatpush1.bf16.msra.mxu0 %v1273
    %1486 = vmatprep.subr.bf16.mxu0 0
    %1487 = vmatpush1.bf16.msra.mxu0 %v1272
    %1488 = vmatprep.subr.bf16.mxu0 0
    %1489 = vmatpush1.bf16.msra.mxu0 %v1271
    %1490 = vmatprep.subr.bf16.mxu0 0
    %1491 = vmatpush2.bf16.msra.mxu0 %v1286
    %1492 = vmatprep.subr.bf16.mxu0 0
    %1493 = vmatpush2.bf16.msra.mxu0 %v1285
    %1494 = vmatprep.subr.bf16.mxu0 0
    %1495 = vmatpush2.bf16.msra.mxu0 %v1284
    %1496 = vmatprep.subr.bf16.mxu0 0
    %1497 = vmatpush2.bf16.msra.mxu0 %v1283
    %1498 = vmatprep.subr.bf16.mxu0 0
    %1499 = vmatpush2.bf16.msra.mxu0 %v1282
    %1500 = vmatprep.subr.bf16.mxu0 0
    %1501 = vmatpush2.bf16.msra.mxu0 %v1281
    %1502 = vmatprep.subr.bf16.mxu0 0
    %1503 = vmatpush2.bf16.msra.mxu0 %v1280
    %1504 = vmatprep.subr.bf16.mxu0 0
    %1505 = vmatpush2.bf16.msra.mxu0 %v1279
    %1506 = vmatprep.mubr.bf16.mxu0 %v154
    %1507 = vmatmul.mubr.bf16.gmra.mxu0 %v153
    %v1508 = vpop.f32.mrf.mxu0
    %v1509 = vadd.f32 %v1468, %v1508
    %v1510 = vpop.f32.mrf.mxu0
    %v1511 = vpop.f32.mrf.mxu0
    %v1512 = vadd.f32 %v1471, %v1511
    %v1513 = vpop.f32.mrf.mxu0
    %1514 = vdwg.mxu0
    %v1515 = vadd.f32 %v837, %v1509
    %v1516 = vadd.f32 %v838, %v1512
    %1517 = vst [vmem:[#allocation3] sm:$0xff] %v1515
    %1518 = vst [vmem:[#allocation3 + $0x8] sm:$0xff] %v1516
    // Predicated region
    $region58: #{tpu_custom_call.1} parent=1 // pred_check
      %p1519 = pneg %p99
    $region59: #{tpu_custom_call.1} parent=1 // pred_check_branch
      %1521 = sbr.rel (%p1519) target = $region61
    $region60: #{tpu_custom_call.1} parent=1 // pred_region
      %v1522 = vld [vmem:[#allocation2] sm:$0xff]
      %v1523 = vld [vmem:[#allocation2 + $0x8] sm:$0xff]
      %v1524 = vld [vmem:[%s4] sm:$0x1]
      %v1526 = vlaneseq
      %v1527 = vshrl.u32 %v1526, 7
      %v1528 = vsub.s32 0, %v1527
      %v1529 = vrot.slane %v1524, %v1528
      %v1531 = vadd.f32 %v1522, %v1529
      %v1532 = vadd.f32 %v1523, %v1529
      %v1533 = vtanh.pop %v1531
      %v1534 = vtanh.pop %v1532
      %v1535 = vld [vmem:[#allocation3] sm:$0xff]
      %v1536 = vld [vmem:[#allocation3 + $0x8] sm:$0xff]
      %v1537 = vld [vmem:[%s5] sm:$0x1]
      %v1539 = vlaneseq
      %v1540 = vshrl.u32 %v1539, 7
      %v1541 = vsub.s32 0, %v1540
      %v1542 = vrot.slane %v1537, %v1541
      %v1544 = vadd.f32 %v1535, %v1542
      %v1545 = vadd.f32 %v1536, %v1542
      %v1546 = vtanh.pop %v1544
      %v1547 = vtanh.pop %v1545
      %v1548 = vpack.c.bf16 %v1534, %v1533
      %v1550 = vunpack.c.l.b16 %v1548
      %v1551 = vunpack.c.h.b16 %v1548
      %v1552 = vpack.c.b16 %v1550, %v1550
      %v1553 = vpack.c.b16 %v1551, %v1551
      %1556 = vst [vmem:[#allocation4] sm:$0xf] %v1552
      %1557 = vst [vmem:[#allocation4 + $0x8] sm:$0xf] %v1553
      %v1558 = vpack.c.bf16 %v1547, %v1546
      %v1560 = vunpack.c.l.b16 %v1558
      %v1561 = vunpack.c.h.b16 %v1558
      %v1562 = vpack.c.b16 %v1560, %v1560
      %v1563 = vpack.c.b16 %v1561, %v1561
      %1566 = vst [vmem:[#allocation4 + $0x4] sm:$0xf] %v1562
      %1567 = vst [vmem:[#allocation4 + $0xc] sm:$0xf] %v1563
      %v1568 = vld [vmem:[#allocation4] sm:$0xff]
      %v1569 = vld [vmem:[#allocation4 + $0x8] sm:$0xff]
      %v1570 = vld [vmem:[#allocation13] sm:$0xf]
      %v1571 = vld [vmem:[#allocation13 + $0x4] sm:$0xf]
      %v1572 = vld [vmem:[#allocation13 + $0x8] sm:$0xf]
      %v1573 = vld [vmem:[#allocation13 + $0xc] sm:$0xf]
      %v1574 = vld [vmem:[#allocation13 + $0x10] sm:$0xf]
      %v1575 = vld [vmem:[#allocation13 + $0x14] sm:$0xf]
      %v1576 = vld [vmem:[#allocation13 + $0x18] sm:$0xf]
      %v1577 = vld [vmem:[#allocation13 + $0x1c] sm:$0xf]
      %v1578 = vld [vmem:[#allocation13 + $0x20] sm:$0xf]
      %v1579 = vld [vmem:[#allocation13 + $0x24] sm:$0xf]
      %v1580 = vld [vmem:[#allocation13 + $0x28] sm:$0xf]
      %v1581 = vld [vmem:[#allocation13 + $0x2c] sm:$0xf]
      %v1582 = vld [vmem:[#allocation13 + $0x30] sm:$0xf]
      %v1583 = vld [vmem:[#allocation13 + $0x34] sm:$0xf]
      %v1584 = vld [vmem:[#allocation13 + $0x38] sm:$0xf]
      %v1585 = vld [vmem:[#allocation13 + $0x3c] sm:$0xf]
      %v1586 = vld [vmem:[#allocation13 + $0x40] sm:$0xf]
      %v1587 = vld [vmem:[#allocation13 + $0x44] sm:$0xf]
      %v1588 = vld [vmem:[#allocation13 + $0x48] sm:$0xf]
      %v1589 = vld [vmem:[#allocation13 + $0x4c] sm:$0xf]
      %v1590 = vld [vmem:[#allocation13 + $0x50] sm:$0xf]
      %v1591 = vld [vmem:[#allocation13 + $0x54] sm:$0xf]
      %v1592 = vld [vmem:[#allocation13 + $0x58] sm:$0xf]
      %v1593 = vld [vmem:[#allocation13 + $0x5c] sm:$0xf]
      %v1594 = vld [vmem:[#allocation13 + $0x60] sm:$0xf]
      %v1595 = vld [vmem:[#allocation13 + $0x64] sm:$0xf]
      %v1596 = vld [vmem:[#allocation13 + $0x68] sm:$0xf]
      %v1597 = vld [vmem:[#allocation13 + $0x6c] sm:$0xf]
      %v1598 = vld [vmem:[#allocation13 + $0x70] sm:$0xf]
      %v1599 = vld [vmem:[#allocation13 + $0x74] sm:$0xf]
      %v1600 = vld [vmem:[#allocation13 + $0x78] sm:$0xf]
      %v1601 = vld [vmem:[#allocation13 + $0x7c] sm:$0xf]
      %v1602 = vld [vmem:[%s7] sm:$0x1]
      %v1604 = vlaneseq
      %v1605 = vshrl.u32 %v1604, 7
      %v1606 = vsub.s32 0, %v1605
      %v1607 = vrot.slane %v1602, %v1606
      %v1611 = vunpack.c.l.b16 %v1568
      %v1612 = vunpack.c.h.b16 %v1568
      %v1613 = vunpack.c.l.b16 %v1569
      %v1614 = vunpack.c.h.b16 %v1569
      %v1615 = vpack.c.b16 %v1613, %v1611
      %v1616 = vpack.c.b16 %v1614, %v1612
      %v1651 = vunpack.c.l.b16 %v1570
      %v1652 = vunpack.c.l.b16 %v1571
      %v1653 = vunpack.c.l.b16 %v1572
      %v1654 = vunpack.c.l.b16 %v1573
      %v1655 = vunpack.c.l.b16 %v1574
      %v1656 = vunpack.c.l.b16 %v1575
      %v1657 = vunpack.c.l.b16 %v1576
      %v1658 = vunpack.c.l.b16 %v1577
      %v1659 = vunpack.c.l.b16 %v1578
      %v1660 = vunpack.c.l.b16 %v1579
      %v1661 = vunpack.c.l.b16 %v1580
      %v1662 = vunpack.c.l.b16 %v1581
      %v1663 = vunpack.c.l.b16 %v1582
      %v1664 = vunpack.c.l.b16 %v1583
      %v1665 = vunpack.c.l.b16 %v1584
      %v1666 = vunpack.c.l.b16 %v1585
      %v1667 = vunpack.c.l.b16 %v1586
      %v1668 = vunpack.c.l.b16 %v1587
      %v1669 = vunpack.c.l.b16 %v1588
      %v1670 = vunpack.c.l.b16 %v1589
      %v1671 = vunpack.c.l.b16 %v1590
      %v1672 = vunpack.c.l.b16 %v1591
      %v1673 = vunpack.c.l.b16 %v1592
      %v1674 = vunpack.c.l.b16 %v1593
      %v1675 = vunpack.c.l.b16 %v1594
      %v1676 = vunpack.c.l.b16 %v1595
      %v1677 = vunpack.c.l.b16 %v1596
      %v1678 = vunpack.c.l.b16 %v1597
      %v1679 = vunpack.c.l.b16 %v1598
      %v1680 = vunpack.c.l.b16 %v1599
      %v1681 = vunpack.c.l.b16 %v1600
      %v1682 = vunpack.c.l.b16 %v1601
      %v1683 = vpack.c.b16 %v1652, %v1651
      %v1684 = vpack.c.b16 %v1654, %v1653
      %v1685 = vpack.c.b16 %v1656, %v1655
      %v1686 = vpack.c.b16 %v1658, %v1657
      %v1687 = vpack.c.b16 %v1660, %v1659
      %v1688 = vpack.c.b16 %v1662, %v1661
      %v1689 = vpack.c.b16 %v1664, %v1663
      %v1690 = vpack.c.b16 %v1666, %v1665
      %v1691 = vpack.c.b16 %v1668, %v1667
      %v1692 = vpack.c.b16 %v1670, %v1669
      %v1693 = vpack.c.b16 %v1672, %v1671
      %v1694 = vpack.c.b16 %v1674, %v1673
      %v1695 = vpack.c.b16 %v1676, %v1675
      %v1696 = vpack.c.b16 %v1678, %v1677
      %v1697 = vpack.c.b16 %v1680, %v1679
      %v1698 = vpack.c.b16 %v1682, %v1681
      %1715 = vmatprep.subr.bf16.mxu0 0
      %1716 = vmatpush1.bf16.msra.mxu0 %v1690
      %1717 = vmatprep.subr.bf16.mxu0 0
      %1718 = vmatpush1.bf16.msra.mxu0 %v1689
      %1719 = vmatprep.subr.bf16.mxu0 0
      %1720 = vmatpush1.bf16.msra.mxu0 %v1688
      %1721 = vmatprep.subr.bf16.mxu0 0
      %1722 = vmatpush1.bf16.msra.mxu0 %v1687
      %1723 = vmatprep.subr.bf16.mxu0 0
      %1724 = vmatpush1.bf16.msra.mxu0 %v1686
      %1725 = vmatprep.subr.bf16.mxu0 0
      %1726 = vmatpush1.bf16.msra.mxu0 %v1685
      %1727 = vmatprep.subr.bf16.mxu0 0
      %1728 = vmatpush1.bf16.msra.mxu0 %v1684
      %1729 = vmatprep.subr.bf16.mxu0 0
      %1730 = vmatpush1.bf16.msra.mxu0 %v1683
      %1731 = vmatprep.subr.bf16.mxu0 0
      %1732 = vmatpush2.bf16.msra.mxu0 %v1698
      %1733 = vmatprep.subr.bf16.mxu0 0
      %1734 = vmatpush2.bf16.msra.mxu0 %v1697
      %1735 = vmatprep.subr.bf16.mxu0 0
      %1736 = vmatpush2.bf16.msra.mxu0 %v1696
      %1737 = vmatprep.subr.bf16.mxu0 0
      %1738 = vmatpush2.bf16.msra.mxu0 %v1695
      %1739 = vmatprep.subr.bf16.mxu0 0
      %1740 = vmatpush2.bf16.msra.mxu0 %v1694
      %1741 = vmatprep.subr.bf16.mxu0 0
      %1742 = vmatpush2.bf16.msra.mxu0 %v1693
      %1743 = vmatprep.subr.bf16.mxu0 0
      %1744 = vmatpush2.bf16.msra.mxu0 %v1692
      %1745 = vmatprep.subr.bf16.mxu0 0
      %1746 = vmatpush2.bf16.msra.mxu0 %v1691
      %1747 = vmatprep.mubr.bf16.mxu0 %v1616
      %1748 = vmatmul.mubr.bf16.gmra.mxu0 %v1615
      %v1749 = vpop.f32.mrf.mxu0
      %v1750 = vadd.f32 %v1607, %v1749
      %v1751 = vpop.f32.mrf.mxu0
      %v1752 = vpop.f32.mrf.mxu0
      %v1753 = vadd.f32 %v1607, %v1752
      %v1754 = vpop.f32.mrf.mxu0
      %1755 = vdwg.mxu0
      %1756 = vmax.xlane.f32.xlu0 %v1750
      %v1757 = vpop.xlane.xlu0 %1756
      %1758 = vmax.xlane.f32.xlu0 %v1753
      %v1759 = vpop.xlane.xlu0 %1758
      %v1760 = vsub.f32 %v1750, %v1757
      %v1761 = vsub.f32 %v1753, %v1759
      %v1762 = vmul.f32 %v1760, 1.442695
      %v1763 = vpow.pop %v1762
      %v1764 = vmul.f32 %v1761, 1.442695
      %v1765 = vpow.pop %v1764
      %1766 = vadd.xlane.f32.xlu0 %v1763
      %v1767 = vpop.xlane.xlu0 %1766
      %1768 = vadd.xlane.f32.xlu0 %v1765
      %v1769 = vpop.xlane.xlu0 %1768
      %v1770 = vrcp.pop %v1767
      %v1771 = vmul.f32 %v1763, %v1770
      %v1772 = vrcp.pop %v1769
      %v1773 = vmul.f32 %v1765, %v1772
      %1774 = vst [vmem:[#allocation14] sm:$0xff] %v1771
      %1775 = vst [vmem:[#allocation14 + $0x8] sm:$0xff] %v1773
    $region61: #{tpu_custom_call.1} parent=1 // pred_fallthru
      _
    // Predicated region
    $region62: #{tpu_custom_call.1} parent=1 // pred_check
      _
    $region63: #{tpu_custom_call.1} parent=1 // pred_check_branch
      %1777 = sbr.rel (0) target = $region65
    $region64: #{tpu_custom_call.1} parent=1 // pred_region
      %s1779 = ssub.s32 256, 256
      %1780 = vsyncadd [#allocation7], %s1779
      %s1781 = sshll.u32 [#allocation14], 4
      %s1782 = int_to_ptr.vmem [resolvable:$true] %s1781
      %1787 = dma.vmem_to_hbm [thread:$0]  %s1782, 256, %s8, [#allocation7], 128, 128, 8
    $region65: #{tpu_custom_call.1} parent=1 // pred_fallthru
      _
    // Predicated region
    $region66: #{tpu_custom_call.1} parent=1 // pred_check
      _
    $region67: #{tpu_custom_call.1} parent=1 // pred_check_branch
      %1789 = sbr.rel (0) target = $region69
    $region68: #{tpu_custom_call.1} parent=1 // pred_region
      %1790 = dma.done [#allocation7], 256
    $region69: #{tpu_custom_call.1} parent=1 // pred_fallthru
      _
    %1791 = vsyncpa [#allocation6], 1
    %1792 = vsyncpa [#allocation9], 1
    %1793 = vsyncpa [#allocation12], 1
    %1794 = vsyncpa [#allocation7], 1

</llo_original>
